<compile_context>
chip_gen: v5e
topology: v5e:2x2
jax: 0.10.0
libtpu: 0.0.40
codegen_flags: <defaults>
</compile_context>

<pallas_src>
import functools
from typing import NamedTuple, Optional

import jax
import jax.numpy as jnp
from jax.experimental import pallas as pl
from jax.experimental.pallas import tpu as pltpu


def _round_up(a, b):
    return (a + b - 1) // b * b


def _vmem_capacity_bytes():
    try:
        return int(pltpu.get_tpu_info().vmem_capacity_bytes)
    except Exception:
        return 128 << 20


def _default_vmem_limit_bytes():
    cap = _vmem_capacity_bytes()
    # Leave more headroom on v7x-class parts (64 MiB/TC) for compiler scratch,
    # semaphores and the f32 gating intermediate.
    headroom = (14 << 20) if cap <= (64 << 20) else (8 << 20)
    return max(32 << 20, cap - headroom)


class SwiGLUPlan(NamedTuple):
    dim: int
    hidden: int
    h_pad: int                       # hidden padded to a multiple of th
    th: int                          # hidden tile width (multiple of chunk)
    chunk: int                       # in-kernel sub-tile of the hidden axis
    tm: int                          # requested row tile
    row_align: int                   # sublane packing for the compute dtype
    compute_dtype: Optional[object]  # MXU operand dtype (None = keep inputs)


def plan_swiglu(dim, hidden, *, tm=None, th=None, compute_dtype=jnp.bfloat16):
    cap = _vmem_capacity_bytes()
    if tm is None:
        # Weight-streaming roofline knees: ~670 flops/byte (v6e), ~311 (v7x).
        tm = 384 if cap <= (64 << 20) else 512
    if th is None:
        th = 256
    itemsize = jnp.dtype(compute_dtype).itemsize if compute_dtype is not None else 4
    row_align = {4: 8, 2: 16, 1: 32}.get(itemsize, 8)
    th_req = min(th, _round_up(hidden, 128))
    th_eff = max(128, (th_req // 128) * 128)          # MXU-lane aligned
    chunk = 256 if th_eff % 256 == 0 else 128
    h_pad = _round_up(hidden, th_eff)
    return SwiGLUPlan(dim, hidden, h_pad, th_eff, chunk, tm, row_align, compute_dtype)


def pack_swiglu_weights(w1_t, w3_t, w2_t, plan):
    """Cast, pad, and interleave [w1 | w3] at `chunk` granularity.

    Call ONCE per set of weights (it reads/writes all 3*dim*hidden in HBM).
    Zero hidden padding is exact: silu(0)*0 == 0 and the padded w2 rows are 0.
    """
    dim, hidden = w1_t.shape
    assert (dim, hidden) == (plan.dim, plan.hidden)
    assert w3_t.shape == (dim, hidden) and w2_t.shape == (hidden, dim)
    if plan.compute_dtype is not None:
        w1_t = w1_t.astype(plan.compute_dtype)
        w3_t = w3_t.astype(plan.compute_dtype)
        w2_t = w2_t.astype(plan.compute_dtype)
    if plan.h_pad != hidden:
        pad = plan.h_pad - hidden
        w1_t = jnp.pad(w1_t, ((0, 0), (0, pad)))
        w3_t = jnp.pad(w3_t, ((0, 0), (0, pad)))
        w2_t = jnp.pad(w2_t, ((0, pad), (0, 0)))
    nc = plan.h_pad // plan.chunk
    w13 = jnp.concatenate(
        [w1_t.reshape(dim, nc, plan.chunk), w3_t.reshape(dim, nc, plan.chunk)],
        axis=2).reshape(dim, 2 * plan.h_pad)
    return w13, w2_t


# ----------------------------- kernels --------------------------------------


def _gated_partial(x_ref, w13_ref, w2_ref, chunk):
    """f32 partial of silu(x@w1_tile) * (x@w3_tile) @ w2_tile.

    Computed in `chunk`-wide slices of the hidden axis so the f32 intermediate
    stays near vreg scale instead of a (tm, 2*th) VMEM spill.
    """
    x = x_ref[...]
    th = w2_ref.shape[0]
    acc = None
    for c0 in range(0, th, chunk):
        # packed layout: [... | w1[:, c0:c0+chunk] | w3[:, c0:c0+chunk] | ...]
        h = jnp.dot(x, w13_ref[:, 2 * c0:2 * c0 + 2 * chunk],
                    preferred_element_type=jnp.float32)
        h1 = h[:, :chunk]
        h3 = h[:, chunk:]
        # SiLU gating in f32 (VPU muls + EUP sigmoid).
        gated = (h1 * jax.nn.sigmoid(h1) * h3).astype(w2_ref.dtype)
        p = jnp.dot(gated, w2_ref[c0:c0 + chunk, :],
                    preferred_element_type=jnp.float32)
        acc = p if acc is None else acc + p
    return acc


def _resident_kernel(x_ref, w13_ref, w2_ref, o_ref, *, chunk):
    # Whole weights resident in VMEM: one row tile per grid step, no reduction.
    o_ref[...] = _gated_partial(x_ref, w13_ref, w2_ref, chunk).astype(o_ref.dtype)


def _stream_kernel(x_ref, w13_ref, w2_ref, o_ref, *scratch, chunk, use_acc):
    # Hidden axis streamed; accumulate into f32 scratch, or directly into the
    # resident f32 output block when the output dtype is already f32.
    acc_ref = scratch[0] if use_acc else o_ref
    k = pl.program_id(1)

    @pl.when(k == 0)
    def _():
        acc_ref[...] = jnp.zeros_like(acc_ref)

    acc_ref[...] += _gated_partial(x_ref, w13_ref, w2_ref, chunk)

    if use_acc:
        @pl.when(k == pl.num_programs(1) - 1)
        def _():
            o_ref[...] = acc_ref[...].astype(o_ref.dtype)


# ----------------------------- wrappers -------------------------------------


def swiglu_ffn_packed(x, w13, w2, plan, *, out_dtype=None,
                      vmem_limit_bytes=None, resident=None):
    """SwiGLU FFN with pre-packed weights.  x: [N, dim]."""
    N, dim = x.shape
    assert dim == plan.dim
    assert w13.shape == (dim, 2 * plan.h_pad) and w2.shape == (plan.h_pad, dim)
    out_dtype = out_dtype or x.dtype
    if plan.compute_dtype is not None:
        x = x.astype(plan.compute_dtype)
    if vmem_limit_bytes is None:
        vmem_limit_bytes = _default_vmem_limit_bytes()

    # ---- row tiling --------------------------------------------------------
    ra = plan.row_align
    tm = max(ra, (min(plan.tm, _round_up(N, ra)) // ra) * ra)
    n_pad = _round_up(N, tm)
    # Ensure the "parallel" row axis has >= 2 tiles so both v7x TCs get work.
    if n_pad // tm < 2 and tm > ra:
        tm = max(ra, _round_up(tm // 2, ra))
        n_pad = _round_up(N, tm)
    if n_pad != N:
        x = jnp.pad(x, ((0, n_pad - N), (0, 0)))
    n_i = n_pad // tm

    # ---- fully-resident-weights fast path -----------------------------------
    if resident is None:
        w_bytes = w13.size * w13.dtype.itemsize + w2.size * w2.dtype.itemsize
        tile_bytes = 2 * tm * dim * (x.dtype.itemsize + jnp.dtype(out_dtype).itemsize)
        interm_bytes = tm * 2 * plan.chunk * 4 + tm * dim * 4
        resident = (2 * w_bytes + tile_bytes + interm_bytes
                    <= int(0.8 * vmem_limit_bytes))

    if resident:
        out = pl.pallas_call(
            functools.partial(_resident_kernel, chunk=plan.chunk),
            out_shape=jax.ShapeDtypeStruct((n_pad, dim), out_dtype),
            grid_spec=pltpu.PrefetchScalarGridSpec(
                num_scalar_prefetch=0,
                grid=(n_i,),
                in_specs=[
                    pl.BlockSpec((tm, dim), lambda i: (i, 0)),             # x rows
                    pl.BlockSpec((dim, 2 * plan.h_pad), lambda i: (0, 0)),  # [w1|w3]
                    pl.BlockSpec((plan.h_pad, dim), lambda i: (0, 0)),      # w2
                ],
                out_specs=pl.BlockSpec((tm, dim), lambda i: (i, 0)),
            ),
            compiler_params=pltpu.CompilerParams(
                dimension_semantics=("parallel",),
                vmem_limit_bytes=vmem_limit_bytes,
            ),
        )(x, w13, w2)
    else:
        n_k = plan.h_pad // plan.th
        use_acc = jnp.dtype(out_dtype) != jnp.float32
        scratch = [pltpu.VMEM((tm, dim), jnp.float32)] if use_acc else []
        out = pl.pallas_call(
            functools.partial(_stream_kernel, chunk=plan.chunk, use_acc=use_acc),
            out_shape=jax.ShapeDtypeStruct((n_pad, dim), out_dtype),
            grid_spec=pltpu.PrefetchScalarGridSpec(
                num_scalar_prefetch=0,
                grid=(n_i, n_k),
                in_specs=[
                    pl.BlockSpec((tm, dim), lambda i, k: (i, 0)),          # x rows
                    pl.BlockSpec((dim, 2 * plan.th), lambda i, k: (0, k)),  # [w1|w3] k
                    pl.BlockSpec((plan.th, dim), lambda i, k: (k, 0)),      # w2 tile k
                ],
                out_specs=pl.BlockSpec((tm, dim), lambda i, k: (i, 0)),
                scratch_shapes=scratch,
            ),
            compiler_params=pltpu.CompilerParams(
                dimension_semantics=("parallel", "arbitrary"),
                vmem_limit_bytes=vmem_limit_bytes,
            ),
        )(x, w13, w2)

    return out[:N] if n_pad != N else out


def swiglu_ffn(x, w1_t, w3_t, w2_t, *, tm=None, th=None,
               compute_dtype=jnp.bfloat16, out_dtype=None,
               vmem_limit_bytes=None, resident=None):
    """y = (silu(x @ w1_t) * (x @ w3_t)) @ w2_t  with weights in [in, out] layout.

    Convenience wrapper that packs the weights per call; for repeated calls
    hoist the packing:
        plan = plan_swiglu(dim, hidden, compute_dtype=jnp.bfloat16)
        w13, w2p = pack_swiglu_weights(w1_t, w3_t, w2_t, plan)   # once
        y = swiglu_ffn_packed(x, w13, w2p, plan)
    """
    dim, hidden = w1_t.shape
    plan = plan_swiglu(dim, hidden, tm=tm, th=th, compute_dtype=compute_dtype)
    w13, w2p = pack_swiglu_weights(w1_t, w3_t, w2_t, plan)
    return swiglu_ffn_packed(x, w13, w2p, plan, out_dtype=out_dtype,
                             vmem_limit_bytes=vmem_limit_bytes, resident=resident)


def swiglu_ref(x, w1_t, w3_t, w2_t):
    h1 = x @ w1_t
    h3 = x @ w3_t
    return (jax.nn.silu(h1) * h3) @ w2_t


if __name__ == "__main__":
    key = jax.random.PRNGKey(0)
    k_x, k1, k2, k3 = jax.random.split(key, 4)

    # Small but tileable shapes: 200 tokens (exercises row padding + megacore
    # split), dim=128, hidden=384 (exercises the hidden reduction / padding).
    N, dim, hidden = 200, 128, 384

    x = jax.random.normal(k_x, (N, dim), dtype=jnp.float32)

    # nn.Linear default init U(-1/sqrt(fan_in), +1/sqrt(fan_in)); weights stored
    # transposed ([in, out]) for row-major MXU matmuls.
    b1 = 1.0 / (dim ** 0.5)
    b2 = 1.0 / (hidden ** 0.5)
    w1_t = jax.random.uniform(k1, (dim, hidden), minval=-b1, maxval=b1, dtype=jnp.float32)
    w3_t = jax.random.uniform(k3, (dim, hidden), minval=-b1, maxval=b1, dtype=jnp.float32)
    w2_t = jax.random.uniform(k2, (hidden, dim), minval=-b2, maxval=b2, dtype=jnp.float32)

    ref = swiglu_ref(x, w1_t, w3_t, w2_t)

    # 1) Default path: bf16 MXU operands, weights packed once (hoisted),
    #    resident-weights fast path auto-selected for these small weights.
    plan = plan_swiglu(dim, hidden, compute_dtype=jnp.bfloat16)
    w13, w2p = pack_swiglu_weights(w1_t, w3_t, w2_t, plan)       # once per weights
    out_bf16 = jax.block_until_ready(swiglu_ffn_packed(x, w13, w2p, plan))
    assert out_bf16.shape == (N, dim) and out_bf16.dtype == jnp.float32
    assert jnp.allclose(out_bf16, ref, atol=0.1, rtol=0.1), "bf16 resident mismatch"

    # 2) f32 MXU operands, forced streamed path (f32 output => no acc scratch,
    #    partials accumulate directly into the resident output block).
    out_f32 = swiglu_ffn(x, w1_t, w3_t, w2_t, tm=128, th=128,
                         compute_dtype=jnp.float32, resident=False)
    out_f32 = jax.block_until_ready(out_f32)
    assert out_f32.shape == (N, dim) and out_f32.dtype == jnp.float32
    assert jnp.allclose(out_f32, ref, atol=2e-3, rtol=2e-3), "f32 streamed mismatch"

    # 3) bf16 activations in / bf16 out, forced streamed path (exercises the
    #    f32 VMEM accumulator branch).
    x_bf16 = x.astype(jnp.bfloat16)
    ref_bf16_in = swiglu_ref(x_bf16.astype(jnp.float32), w1_t, w3_t, w2_t)
    out_bf16_io = swiglu_ffn(x_bf16, w1_t, w3_t, w2_t, tm=128, th=128,
                             compute_dtype=jnp.bfloat16, resident=False)
    out_bf16_io = jax.block_until_ready(out_bf16_io)
    assert out_bf16_io.shape == (N, dim) and out_bf16_io.dtype == jnp.bfloat16
    assert jnp.allclose(out_bf16_io.astype(jnp.float32), ref_bf16_in,
                        atol=0.1, rtol=0.1), "bf16 io streamed mismatch"

    print("KERNEL_OK")
</pallas_src>

<mosaic_0001>
module attributes {stable_mosaic.version = 11 : i64} {
  func.func @_resident_kernel(%arg0: i32, %arg1: memref<112x128xbf16, #tpu.memory_space<vmem>>, %arg2: memref<128x1024xbf16, #tpu.memory_space<vmem>>, %arg3: memref<512x128xbf16, #tpu.memory_space<vmem>>, %arg4: memref<112x128xf32, #tpu.memory_space<vmem>>) attributes {dimension_semantics = [#tpu.dimension_semantics<parallel>], iteration_bounds = array<i64: 2>, scalar_prefetch = 0 : i64, scratch_operands = 0 : i64, tpu.core_type = #tpu.core_type<tc>, window_params = [{transform_indices = @transform_0, window_bounds = array<i64: 112, 128>}, {pipeline_mode = #tpu.pipeline_mode<synchronous>, transform_indices = @transform_1, window_bounds = array<i64: 128, 1024>}, {pipeline_mode = #tpu.pipeline_mode<synchronous>, transform_indices = @transform_2, window_bounds = array<i64: 512, 128>}, {transform_indices = @transform_3, window_bounds = array<i64: 112, 128>}]} {
    %c0 = arith.constant 0 : index
    %c0_0 = arith.constant 0 : index
    %0 = vector.load %arg1[%c0, %c0_0] : memref<112x128xbf16, #tpu.memory_space<vmem>>, vector<112x128xbf16>
    %c0_1 = arith.constant 0 : index
    %c0_2 = arith.constant 0 : index
    %1 = vector.load %arg2[%c0_1, %c0_2] : memref<128x1024xbf16, #tpu.memory_space<vmem>>, vector<128x512xbf16>
    %cst = arith.constant dense<0.000000e+00> : vector<112x512xf32>
    %2 = tpu.matmul %0, %1, %cst {dimension_numbers = #tpu.dot_dimension_numbers<[1], [0], [0], [1], [0, 0, 1, 1], [], []>} : vector<112x128xbf16>, vector<128x512xbf16>, vector<112x512xf32> -> vector<112x512xf32>
    %3 = vector.extract_strided_slice %2 {offsets = [0, 0], sizes = [112, 256], strides = [1, 1]} : vector<112x512xf32> to vector<112x256xf32>
    %4 = vector.extract_strided_slice %2 {offsets = [0, 256], sizes = [112, 256], strides = [1, 1]} : vector<112x512xf32> to vector<112x256xf32>
    %5 = arith.negf %3 : vector<112x256xf32>
    %6 = math.exp %5 : vector<112x256xf32>
    %cst_3 = arith.constant 1.000000e+00 : f32
    %7 = vector.broadcast %cst_3 : f32 to vector<112x256xf32>
    %8 = arith.addf %7, %6 : vector<112x256xf32>
    %9 = arith.divf %7, %8 : vector<112x256xf32>
    %10 = arith.mulf %3, %9 : vector<112x256xf32>
    %11 = arith.mulf %10, %4 : vector<112x256xf32>
    %12 = arith.truncf %11 : vector<112x256xf32> to vector<112x256xbf16>
    %c0_4 = arith.constant 0 : index
    %c0_5 = arith.constant 0 : index
    %13 = vector.load %arg3[%c0_4, %c0_5] : memref<512x128xbf16, #tpu.memory_space<vmem>>, vector<256x128xbf16>
    %cst_6 = arith.constant dense<0.000000e+00> : vector<112x128xf32>
    %14 = tpu.matmul %12, %13, %cst_6 {dimension_numbers = #tpu.dot_dimension_numbers<[1], [0], [0], [1], [0, 0, 1, 1], [], []>} : vector<112x256xbf16>, vector<256x128xbf16>, vector<112x128xf32> -> vector<112x128xf32>
    %c0_7 = arith.constant 0 : index
    %c512 = arith.constant 512 : index
    %15 = vector.load %arg2[%c0_7, %c512] : memref<128x1024xbf16, #tpu.memory_space<vmem>>, vector<128x512xbf16>
    %cst_8 = arith.constant dense<0.000000e+00> : vector<112x512xf32>
    %16 = tpu.matmul %0, %15, %cst_8 {dimension_numbers = #tpu.dot_dimension_numbers<[1], [0], [0], [1], [0, 0, 1, 1], [], []>} : vector<112x128xbf16>, vector<128x512xbf16>, vector<112x512xf32> -> vector<112x512xf32>
    %17 = vector.extract_strided_slice %16 {offsets = [0, 0], sizes = [112, 256], strides = [1, 1]} : vector<112x512xf32> to vector<112x256xf32>
    %18 = vector.extract_strided_slice %16 {offsets = [0, 256], sizes = [112, 256], strides = [1, 1]} : vector<112x512xf32> to vector<112x256xf32>
    %19 = arith.negf %17 : vector<112x256xf32>
    %20 = math.exp %19 : vector<112x256xf32>
    %cst_9 = arith.constant 1.000000e+00 : f32
    %21 = vector.broadcast %cst_9 : f32 to vector<112x256xf32>
    %22 = arith.addf %21, %20 : vector<112x256xf32>
    %23 = arith.divf %21, %22 : vector<112x256xf32>
    %24 = arith.mulf %17, %23 : vector<112x256xf32>
    %25 = arith.mulf %24, %18 : vector<112x256xf32>
    %26 = arith.truncf %25 : vector<112x256xf32> to vector<112x256xbf16>
    %c256 = arith.constant 256 : index
    %c0_10 = arith.constant 0 : index
    %27 = vector.load %arg3[%c256, %c0_10] : memref<512x128xbf16, #tpu.memory_space<vmem>>, vector<256x128xbf16>
    %cst_11 = arith.constant dense<0.000000e+00> : vector<112x128xf32>
    %28 = tpu.matmul %26, %27, %cst_11 {dimension_numbers = #tpu.dot_dimension_numbers<[1], [0], [0], [1], [0, 0, 1, 1], [], []>} : vector<112x256xbf16>, vector<256x128xbf16>, vector<112x128xf32> -> vector<112x128xf32>
    %29 = arith.addf %14, %28 : vector<112x128xf32>
    %c0_12 = arith.constant 0 : index
    %c0_13 = arith.constant 0 : index
    %30 = vector.load %arg4[%c0_12, %c0_13] : memref<112x128xf32, #tpu.memory_space<vmem>>, vector<112x128xf32>
    tpu.vector_store %arg4[%c0_12, %c0_13], %29 {strides = array<i32>} : memref<112x128xf32, #tpu.memory_space<vmem>>, vector<112x128xf32>,
    return
  }
  func.func @transform_0(%arg0: i32) -> (i32, i32) {
    %c0_i32 = arith.constant 0 : i32
    %c0_i32_0 = arith.constant 0 : i32
    return %arg0, %c0_i32 : i32, i32
  }
  func.func @transform_1(%arg0: i32) -> (i32, i32) {
    %c0_i32 = arith.constant 0 : i32
    %c0_i32_0 = arith.constant 0 : i32
    %c0_i32_1 = arith.constant 0 : i32
    return %c0_i32, %c0_i32_0 : i32, i32
  }
  func.func @transform_2(%arg0: i32) -> (i32, i32) {
    %c0_i32 = arith.constant 0 : i32
    %c0_i32_0 = arith.constant 0 : i32
    %c0_i32_1 = arith.constant 0 : i32
    return %c0_i32, %c0_i32_0 : i32, i32
  }
  func.func @transform_3(%arg0: i32) -> (i32, i32) {
    %c0_i32 = arith.constant 0 : i32
    %c0_i32_0 = arith.constant 0 : i32
    return %arg0, %c0_i32 : i32, i32
  }
}

</mosaic_0001>

<llo_original>
// kernel: tpu_custom_call.1
$region0: #{tpu_custom_call.1}
  #allocation0 [shape = 'u32[]', space=smem, size = 0x4, offset = 0x4, fixed_abs, tag = 'smem constant byte address 0x4 - core index']
  #allocation1 [shape = 'u32[72,128]{1,0:T(1,128)}', space=vmem, size = 0x9000, scoped, tag = 'internal scratch']
  %s0 = inlined_call_operand.hbm [shape: bf16[224,128], index: 0, kind: input, shape index: {}]
  %s1 = inlined_call_operand.hbm [shape: bf16[128,1024], index: 1, kind: input, shape index: {}]
  %s2 = inlined_call_operand.hbm [shape: bf16[512,128], index: 2, kind: input, shape index: {}]
  %s3 = inlined_call_operand.hbm [shape: f32[224,128], index: 3, kind: output, shape index: {}]
  %s4 = sld [smem:[#allocation0]]
  $region57: #{tpu_custom_call.1} parent=0
    _
  %s6 = ssub.s32 1, %s4
  %s7 = scalar_select 0, %s6, %s4
  $region1: #{tpu_custom_call.1} parent=0
    #allocation2 [shape = 'u8[57344]{0}', space=vmem, size = 0xe000, scoped, tag = 'input window, operand 0']
    #allocation3 [shape = 's32[2]{0}', space=sflag, size = 0x8, scoped, tag = 'scoped memory for tpu_custom_call.1']
    #allocation4 [shape = 's32[2]{0}', space=sflag, size = 0x8, scoped, tag = 'scoped memory for tpu_custom_call.1']
    #allocation5 [shape = 'u8[262144]{0}', space=vmem, size = 0x40000, scoped, tag = 'input window, operand 1, single buffered']
    #allocation6 [shape = 's32[1]{0}', space=sflag, size = 0x4, scoped, tag = 'scoped memory for tpu_custom_call.1']
    #allocation7 [shape = 'u8[131072]{0}', space=vmem, size = 0x20000, scoped, tag = 'input window, operand 2, single buffered']
    #allocation8 [shape = 'u8[114688]{0}', space=vmem, size = 0x1c000, scoped, tag = 'output window, operand 0']
    %8 = vsyncpa [#allocation3], 0
    %s9 = scalar_lea.sflag [#allocation3], 1
    %10 = vsyncpa %s9, 0
    %11 = vsyncpa [#allocation6], 0
    %12 = vsyncpa [#allocation4], 0
    %s13 = scalar_lea.sflag [#allocation4], 1
    %14 = vsyncpa %s13, 0
    loop: start=0, step=1, limit=4
    $region2: #{tpu_custom_call.1} parent=1 // loop_pre_header
      _
    $region3: #{tpu_custom_call.1} parent=1 // loop_header
      %s16 = sphi 0, %s20
      %p17 = scmp.ge.s32.totalorder %s16, 4
      %s26 = sphi 0, %s28
      %s29 = sphi 0, %s26
      %s30 = sphi 0, %s29
      %s46 = sphi 0, %s30
      %s50 = sphi 0, %s50
      %s52 = sphi 0, %s50
      %s53 = sphi 0, %s52
      %s67 = sphi 0, %s53
      %s71 = sphi 0, %s71
      %s73 = sphi 0, %s71
      %s74 = sphi 0, %s73
      %s88 = sphi 0, %s74
      %s94 = sphi 0, %s96
      %s97 = sphi 0, %s94
      %s98 = sphi 0, %s97
      %s114 = sphi 0, %s98
    $region4: #{tpu_custom_call.1} parent=1 // loop_header_branch
      %19 = sbr.rel (%p17) target = $region8
    $region5: #{tpu_custom_call.1} parent=1 // loop_body
      %s21 = ssub.s32 %s16, 1
      %s22 = ssub.s32 %s16, 2
      %s23 = sadd.s32 %s16, 1
      %s24 = ssub.s32 %s16, %s23
      %p25 = scmp.eq.s32.totalorder %s24, 0
      %s27 = sadd.s32 %s26, 1
      %s28 = scalar_select %p25, %s26, %s27
      %p31 = pneg %p25
      %p32 = scmp.eq.s32.totalorder %s16, 1
      %p33 = por %p31, %p32
      %p34 = scmp.ne.s32.totalorder %s26, %s29
      %p35 = scmp.eq.s32.totalorder %s16, 0
      %p36 = por %p34, %p35
      %p37 = scmp.ne.s32.totalorder %s26, %s29
      %p38 = scmp.eq.s32.totalorder %s21, 1
      %p39 = por %p37, %p38
      %p40 = scmp.ne.s32.totalorder %s29, %s30
      %p41 = scmp.eq.s32.totalorder %s21, 0
      %p42 = por %p40, %p41
      %p43 = scmp.ne.s32.totalorder %s29, %s30
      %p44 = scmp.eq.s32.totalorder %s22, 1
      %p45 = por %p43, %p44
      %p47 = scmp.ne.s32.totalorder %s30, %s46
      %p48 = scmp.eq.s32.totalorder %s22, 0
      %p49 = por %p47, %p48
      %s51 = sadd.s32 %s50, 1
      %p54 = scmp.eq.s32.totalorder %s16, 1
      %p55 = scmp.ne.s32.totalorder %s50, %s52
      %p56 = scmp.eq.s32.totalorder %s16, 0
      %p57 = por %p55, %p56
      %p58 = scmp.ne.s32.totalorder %s50, %s52
      %p59 = scmp.eq.s32.totalorder %s21, 1
      %p60 = por %p58, %p59
      %p61 = scmp.ne.s32.totalorder %s52, %s53
      %p62 = scmp.eq.s32.totalorder %s21, 0
      %p63 = por %p61, %p62
      %p64 = scmp.ne.s32.totalorder %s52, %s53
      %p65 = scmp.eq.s32.totalorder %s22, 1
      %p66 = por %p64, %p65
      %p68 = scmp.ne.s32.totalorder %s53, %s67
      %p69 = scmp.eq.s32.totalorder %s22, 0
      %p70 = por %p68, %p69
      %s72 = sadd.s32 %s71, 1
      %p75 = scmp.eq.s32.totalorder %s16, 1
      %p76 = scmp.ne.s32.totalorder %s71, %s73
      %p77 = scmp.eq.s32.totalorder %s16, 0
      %p78 = por %p76, %p77
      %p79 = scmp.ne.s32.totalorder %s71, %s73
      %p80 = scmp.eq.s32.totalorder %s21, 1
      %p81 = por %p79, %p80
      %p82 = scmp.ne.s32.totalorder %s73, %s74
      %p83 = scmp.eq.s32.totalorder %s21, 0
      %p84 = por %p82, %p83
      %p85 = scmp.ne.s32.totalorder %s73, %s74
      %p86 = scmp.eq.s32.totalorder %s22, 1
      %p87 = por %p85, %p86
      %p89 = scmp.ne.s32.totalorder %s74, %s88
      %p90 = scmp.eq.s32.totalorder %s22, 0
      %p91 = por %p89, %p90
      %s92 = ssub.s32 %s16, %s23
      %p93 = scmp.eq.s32.totalorder %s92, 0
      %s95 = sadd.s32 %s94, 1
      %s96 = scalar_select %p93, %s94, %s95
      %p99 = pneg %p93
      %p100 = scmp.eq.s32.totalorder %s16, 1
      %p101 = por %p99, %p100
      %p102 = scmp.ne.s32.totalorder %s94, %s97
      %p103 = scmp.eq.s32.totalorder %s16, 0
      %p104 = por %p102, %p103
      %p105 = scmp.ne.s32.totalorder %s94, %s97
      %p106 = scmp.eq.s32.totalorder %s21, 1
      %p107 = por %p105, %p106
      %p108 = scmp.ne.s32.totalorder %s97, %s98
      %p109 = scmp.eq.s32.totalorder %s21, 0
      %p110 = por %p108, %p109
      %p111 = scmp.ne.s32.totalorder %s97, %s98
      %p112 = scmp.eq.s32.totalorder %s22, 1
      %p113 = por %p111, %p112
      %p115 = scmp.ne.s32.totalorder %s98, %s114
      %p116 = scmp.eq.s32.totalorder %s22, 0
      %p117 = por %p115, %p116
      %p118 = scmp.le.s32.totalorder 1, %s16
      %p119 = scmp.lt.s32.totalorder %s16, 3
      %p120 = pnand %p118, %p119
      %p121 = pneg %p120
      // Predicated region
      $region9: #{tpu_custom_call.1} parent=5 // pred_check
        _
      $region10: #{tpu_custom_call.1} parent=5 // pred_check_branch
        %123 = sbr.rel (%p120) target = $region12
      $region11: #{tpu_custom_call.1} parent=5 // pred_region
        %s124 = ssub.s32 %s16, 1
        // Predicated region
        $region13: #{tpu_custom_call.1} parent=11 // pred_check
          %p125 = pneg %p63
        $region14: #{tpu_custom_call.1} parent=11 // pred_check_branch
          %127 = sbr.rel (%p125) target = $region16
        $region15: #{tpu_custom_call.1} parent=11 // pred_region
          %129 = vsyncadd [#allocation6], 0
          %s130 = sshll.u32 %s1, 4
          %s131 = int_to_ptr.hbm [resolvable:$true] %s130
          %s132 = sshll.u32 [#allocation5], 4
          %s133 = int_to_ptr.vmem [resolvable:$true] %s132
          %138 = dma.hbm_to_vmem [thread:$0]  %s131, 8192, %s133, [#allocation6], 512, 512, 32
        $region16: #{tpu_custom_call.1} parent=11 // pred_fallthru
          _
        // Predicated region
        $region17: #{tpu_custom_call.1} parent=11 // pred_check
          %p139 = pneg %p84
        $region18: #{tpu_custom_call.1} parent=11 // pred_check_branch
          %141 = sbr.rel (%p139) target = $region20
        $region19: #{tpu_custom_call.1} parent=11 // pred_region
          %143 = vsyncadd [#allocation6], 0
          %s144 = sshll.u32 %s2, 4
          %s145 = int_to_ptr.hbm [resolvable:$true] %s144
          %s146 = sshll.u32 [#allocation7], 4
          %s147 = int_to_ptr.vmem [resolvable:$true] %s146
          %152 = dma.hbm_to_vmem [thread:$0]  %s145, 4096, %s147, [#allocation6], 64, 64, 4
        $region20: #{tpu_custom_call.1} parent=11 // pred_fallthru
          _
      $region12: #{tpu_custom_call.1} parent=5 // pred_fallthru
        _
      %p153 = scmp.lt.s32.totalorder %s16, 2
      // Predicated region
      $region21: #{tpu_custom_call.1} parent=5 // pred_check
        %p154 = pneg %p153
      $region22: #{tpu_custom_call.1} parent=5 // pred_check_branch
        %156 = sbr.rel (%p154) target = $region24
      $region23: #{tpu_custom_call.1} parent=5 // pred_region
        // Predicated region
        $region25: #{tpu_custom_call.1} parent=23 // pred_check
          %p157 = pneg %p36
        $region26: #{tpu_custom_call.1} parent=23 // pred_check_branch
          %159 = sbr.rel (%p157) target = $region28
        $region27: #{tpu_custom_call.1} parent=23 // pred_region
          %s160 = sand.u32 %s26, 1
          %s161 = scalar_lea.sflag [#allocation3], %s160
          %s162 = sand.u32 %s26, 1
          %s163 = smul.addr %s162, 56
          %s164 = scalar_lea.vmem [#allocation2], %s163
          %s165 = smul.u32 14, %s16
          %167 = vsyncadd %s161, 0
          %s168 = smul.addr %s165, 4
          %s169 = scalar_lea.hbm %s0, %s168
          %s170 = sshll.u32 %s169, 4
          %s171 = int_to_ptr.hbm [resolvable:$true] %s170
          %s172 = sshll.u32 %s164, 4
          %s173 = int_to_ptr.vmem [resolvable:$true] %s172
          %178 = dma.hbm_to_vmem [thread:$0]  %s171, 896, %s173, %s161, 64, 64, 4
        $region28: #{tpu_custom_call.1} parent=23 // pred_fallthru
          _
      $region24: #{tpu_custom_call.1} parent=5 // pred_fallthru
        _
      %p179 = scmp.le.s32.totalorder 1, %s16
      %p180 = scmp.lt.s32.totalorder %s16, 3
      %p181 = pnand %p179, %p180
      %p182 = pneg %p181
      // Predicated region
      $region29: #{tpu_custom_call.1} parent=5 // pred_check
        _
      $region30: #{tpu_custom_call.1} parent=5 // pred_check_branch
        %184 = sbr.rel (%p181) target = $region32
      $region31: #{tpu_custom_call.1} parent=5 // pred_region
        %s185 = ssub.s32 %s16, 1
        %s186 = sand.u32 %s29, 1
        %s187 = scalar_lea.sflag [#allocation3], %s186
        %s188 = sand.u32 %s29, 1
        %s189 = smul.addr %s188, 56
        %s190 = scalar_lea.vmem [#allocation2], %s189
        // Predicated region
        $region33: #{tpu_custom_call.1} parent=31 // pred_check
          %p191 = pneg %p42
        $region34: #{tpu_custom_call.1} parent=31 // pred_check_branch
          %193 = sbr.rel (%p191) target = $region36
        $region35: #{tpu_custom_call.1} parent=31 // pred_region
          %195 = dma.done %s187, 896
        $region36: #{tpu_custom_call.1} parent=31 // pred_fallthru
          _
        // Predicated region
        $region37: #{tpu_custom_call.1} parent=31 // pred_check
          %p196 = pneg %p63
        $region38: #{tpu_custom_call.1} parent=31 // pred_check_branch
          %198 = sbr.rel (%p196) target = $region40
        $region39: #{tpu_custom_call.1} parent=31 // pred_region
          %200 = dma.done [#allocation6], 8192
        $region40: #{tpu_custom_call.1} parent=31 // pred_fallthru
          _
        // Predicated region
        $region41: #{tpu_custom_call.1} parent=31 // pred_check
          %p201 = pneg %p84
        $region42: #{tpu_custom_call.1} parent=31 // pred_check_branch
          %203 = sbr.rel (%p201) target = $region44
        $region43: #{tpu_custom_call.1} parent=31 // pred_region
          %205 = dma.done [#allocation6], 4096
        $region44: #{tpu_custom_call.1} parent=31 // pred_fallthru
          _
        %s206 = sand.u32 %s29, 1
        %s207 = scalar_lea.sflag [#allocation3], %s206
        %s208 = sand.u32 %s29, 1
        %s209 = smul.addr %s208, 56
        %s210 = scalar_lea.vmem [#allocation2], %s209
        %p211 = pneg %p42
        %p212 = pneg %p39
        %p213 = pneg %p63
        %p214 = pneg %p60
        %p215 = pneg %p84
        %p216 = pneg %p81
        %p217 = pneg %p110
        %p218 = pneg %p107
        %s219 = sand.u32 %s97, 1
        %s220 = scalar_lea.sflag [#allocation4], %s219
        %s221 = sand.u32 %s97, 1
        %s222 = smul.addr %s221, 112
        %s223 = scalar_lea.vmem [#allocation8], %s222
        %s224 = smul.u32 14, %s21
        %s225 = smul.u32 14, %s21
        %v226 = vld [vmem:[%s190] sm:$0xf]
        %v227 = vld [vmem:[%s190 + $0x4] sm:$0xf]
        %v228 = vld [vmem:[%s190 + $0x8] sm:$0xf]
        %v229 = vld [vmem:[%s190 + $0xc] sm:$0xf]
        %v230 = vld [vmem:[%s190 + $0x10] sm:$0xf]
        %v231 = vld [vmem:[%s190 + $0x14] sm:$0xf]
        %v232 = vld [vmem:[%s190 + $0x18] sm:$0xf]
        %v233 = vld [vmem:[%s190 + $0x1c] sm:$0xf]
        %v234 = vld [vmem:[%s190 + $0x20] sm:$0xf]
        %v235 = vld [vmem:[%s190 + $0x24] sm:$0xf]
        %v236 = vld [vmem:[%s190 + $0x28] sm:$0xf]
        %v237 = vld [vmem:[%s190 + $0x2c] sm:$0xf]
        %v238 = vld [vmem:[%s190 + $0x30] sm:$0xf]
        %v239 = vld [vmem:[%s190 + $0x34] sm:$0xf]
        %v240 = vld [vmem:[#allocation5] sm:$0xff]
        %v241 = vld [vmem:[#allocation5 + $0x8] sm:$0xff]
        %v242 = vld [vmem:[#allocation5 + $0x20] sm:$0xff]
        %v243 = vld [vmem:[#allocation5 + $0x28] sm:$0xff]
        %v244 = vld [vmem:[#allocation5 + $0x40] sm:$0xff]
        %v245 = vld [vmem:[#allocation5 + $0x48] sm:$0xff]
        %v246 = vld [vmem:[#allocation5 + $0x60] sm:$0xff]
        %v247 = vld [vmem:[#allocation5 + $0x68] sm:$0xff]
        %v248 = vld [vmem:[#allocation5 + $0x80] sm:$0xff]
        %v249 = vld [vmem:[#allocation5 + $0x88] sm:$0xff]
        %v250 = vld [vmem:[#allocation5 + $0xa0] sm:$0xff]
        %v251 = vld [vmem:[#allocation5 + $0xa8] sm:$0xff]
        %v252 = vld [vmem:[#allocation5 + $0xc0] sm:$0xff]
        %v253 = vld [vmem:[#allocation5 + $0xc8] sm:$0xff]
        %v254 = vld [vmem:[#allocation5 + $0xe0] sm:$0xff]
        %v255 = vld [vmem:[#allocation5 + $0xe8] sm:$0xff]
        %v256 = vld [vmem:[#allocation5 + $0x100] sm:$0xff]
        %v257 = vld [vmem:[#allocation5 + $0x108] sm:$0xff]
        %v258 = vld [vmem:[#allocation5 + $0x120] sm:$0xff]
        %v259 = vld [vmem:[#allocation5 + $0x128] sm:$0xff]
        %v260 = vld [vmem:[#allocation5 + $0x140] sm:$0xff]
        %v261 = vld [vmem:[#allocation5 + $0x148] sm:$0xff]
        %v262 = vld [vmem:[#allocation5 + $0x160] sm:$0xff]
        %v263 = vld [vmem:[#allocation5 + $0x168] sm:$0xff]
        %v264 = vld [vmem:[#allocation5 + $0x180] sm:$0xff]
        %v265 = vld [vmem:[#allocation5 + $0x188] sm:$0xff]
        %v266 = vld [vmem:[#allocation5 + $0x1a0] sm:$0xff]
        %v267 = vld [vmem:[#allocation5 + $0x1a8] sm:$0xff]
        %v268 = vld [vmem:[#allocation5 + $0x1c0] sm:$0xff]
        %v269 = vld [vmem:[#allocation5 + $0x1c8] sm:$0xff]
        %v270 = vld [vmem:[#allocation5 + $0x1e0] sm:$0xff]
        %v271 = vld [vmem:[#allocation5 + $0x1e8] sm:$0xff]
        %v286 = vunpack.c.l.b16 %v226
        %v287 = vunpack.c.l.b16 %v227
        %v288 = vunpack.c.l.b16 %v228
        %v289 = vunpack.c.l.b16 %v229
        %v290 = vunpack.c.l.b16 %v230
        %v291 = vunpack.c.l.b16 %v231
        %v292 = vunpack.c.l.b16 %v232
        %v293 = vunpack.c.l.b16 %v233
        %v294 = vunpack.c.l.b16 %v234
        %v295 = vunpack.c.l.b16 %v235
        %v296 = vunpack.c.l.b16 %v236
        %v297 = vunpack.c.l.b16 %v237
        %v298 = vunpack.c.l.b16 %v238
        %v299 = vunpack.c.l.b16 %v239
        %v300 = vpack.c.b16 %v287, %v286
        %v301 = vpack.c.b16 %v289, %v288
        %v302 = vpack.c.b16 %v291, %v290
        %v303 = vpack.c.b16 %v293, %v292
        %v304 = vpack.c.b16 %v295, %v294
        %v305 = vpack.c.b16 %v297, %v296
        %v306 = vpack.c.b16 %v299, %v298
        %v346 = vunpack.c.l.b16 %v240
        %v347 = vunpack.c.h.b16 %v240
        %v348 = vunpack.c.l.b16 %v241
        %v349 = vunpack.c.h.b16 %v241
        %v350 = vunpack.c.l.b16 %v242
        %v351 = vunpack.c.h.b16 %v242
        %v352 = vunpack.c.l.b16 %v243
        %v353 = vunpack.c.h.b16 %v243
        %v354 = vunpack.c.l.b16 %v244
        %v355 = vunpack.c.h.b16 %v244
        %v356 = vunpack.c.l.b16 %v245
        %v357 = vunpack.c.h.b16 %v245
        %v358 = vunpack.c.l.b16 %v246
        %v359 = vunpack.c.h.b16 %v246
        %v360 = vunpack.c.l.b16 %v247
        %v361 = vunpack.c.h.b16 %v247
        %v362 = vunpack.c.l.b16 %v248
        %v363 = vunpack.c.h.b16 %v248
        %v364 = vunpack.c.l.b16 %v249
        %v365 = vunpack.c.h.b16 %v249
        %v366 = vunpack.c.l.b16 %v250
        %v367 = vunpack.c.h.b16 %v250
        %v368 = vunpack.c.l.b16 %v251
        %v369 = vunpack.c.h.b16 %v251
        %v370 = vunpack.c.l.b16 %v252
        %v371 = vunpack.c.h.b16 %v252
        %v372 = vunpack.c.l.b16 %v253
        %v373 = vunpack.c.h.b16 %v253
        %v374 = vunpack.c.l.b16 %v254
        %v375 = vunpack.c.h.b16 %v254
        %v376 = vunpack.c.l.b16 %v255
        %v377 = vunpack.c.h.b16 %v255
        %v378 = vunpack.c.l.b16 %v256
        %v379 = vunpack.c.h.b16 %v256
        %v380 = vunpack.c.l.b16 %v257
        %v381 = vunpack.c.h.b16 %v257
        %v382 = vunpack.c.l.b16 %v258
        %v383 = vunpack.c.h.b16 %v258
        %v384 = vunpack.c.l.b16 %v259
        %v385 = vunpack.c.h.b16 %v259
        %v386 = vunpack.c.l.b16 %v260
        %v387 = vunpack.c.h.b16 %v260
        %v388 = vunpack.c.l.b16 %v261
        %v389 = vunpack.c.h.b16 %v261
        %v390 = vunpack.c.l.b16 %v262
        %v391 = vunpack.c.h.b16 %v262
        %v392 = vunpack.c.l.b16 %v263
        %v393 = vunpack.c.h.b16 %v263
        %v394 = vunpack.c.l.b16 %v264
        %v395 = vunpack.c.h.b16 %v264
        %v396 = vunpack.c.l.b16 %v265
        %v397 = vunpack.c.h.b16 %v265
        %v398 = vunpack.c.l.b16 %v266
        %v399 = vunpack.c.h.b16 %v266
        %v400 = vunpack.c.l.b16 %v267
        %v401 = vunpack.c.h.b16 %v267
        %v402 = vunpack.c.l.b16 %v268
        %v403 = vunpack.c.h.b16 %v268
        %v404 = vunpack.c.l.b16 %v269
        %v405 = vunpack.c.h.b16 %v269
        %v406 = vunpack.c.l.b16 %v270
        %v407 = vunpack.c.h.b16 %v270
        %v408 = vunpack.c.l.b16 %v271
        %v409 = vunpack.c.h.b16 %v271
        %v410 = vpack.c.b16 %v350, %v346
        %v411 = vpack.c.b16 %v351, %v347
        %v412 = vpack.c.b16 %v352, %v348
        %v413 = vpack.c.b16 %v353, %v349
        %v414 = vpack.c.b16 %v358, %v354
        %v415 = vpack.c.b16 %v359, %v355
        %v416 = vpack.c.b16 %v360, %v356
        %v417 = vpack.c.b16 %v361, %v357
        %v418 = vpack.c.b16 %v366, %v362
        %v419 = vpack.c.b16 %v367, %v363
        %v420 = vpack.c.b16 %v368, %v364
        %v421 = vpack.c.b16 %v369, %v365
        %v422 = vpack.c.b16 %v374, %v370
        %v423 = vpack.c.b16 %v375, %v371
        %v424 = vpack.c.b16 %v376, %v372
        %v425 = vpack.c.b16 %v377, %v373
        %v426 = vpack.c.b16 %v382, %v378
        %v427 = vpack.c.b16 %v383, %v379
        %v428 = vpack.c.b16 %v384, %v380
        %v429 = vpack.c.b16 %v385, %v381
        %v430 = vpack.c.b16 %v390, %v386
        %v431 = vpack.c.b16 %v391, %v387
        %v432 = vpack.c.b16 %v392, %v388
        %v433 = vpack.c.b16 %v393, %v389
        %v434 = vpack.c.b16 %v398, %v394
        %v435 = vpack.c.b16 %v399, %v395
        %v436 = vpack.c.b16 %v400, %v396
        %v437 = vpack.c.b16 %v401, %v397
        %v438 = vpack.c.b16 %v406, %v402
        %v439 = vpack.c.b16 %v407, %v403
        %v440 = vpack.c.b16 %v408, %v404
        %v441 = vpack.c.b16 %v409, %v405
        %474 = vmatpush.bf16.msra.mxu0 %v438
        %475 = vmatpush.bf16.msra.mxu0 %v434
        %476 = vmatpush.bf16.msra.mxu0 %v430
        %477 = vmatpush.bf16.msra.mxu0 %v426
        %478 = vmatpush.bf16.msra.mxu0 %v422
        %479 = vmatpush.bf16.msra.mxu0 %v418
        %480 = vmatpush.bf16.msra.mxu0 %v414
        %481 = vmatpush.bf16.msra.mxu0 %v410
        %482 = vmatmul.bf16.gmra.mxu0 %v300
        %v483 = vpop.f32.mrf.mxu0
        %v484 = vadd.f32 0.0, %v483
        %v485 = vpop.f32.mrf.mxu0
        %v486 = vadd.f32 0.0, %v485
        %487 = vmatmul.bf16.gmra.mxu0 %v301
        %v488 = vpop.f32.mrf.mxu0
        %v489 = vadd.f32 0.0, %v488
        %v490 = vpop.f32.mrf.mxu0
        %v491 = vadd.f32 0.0, %v490
        %492 = vmatmul.bf16.gmra.mxu0 %v302
        %v493 = vpop.f32.mrf.mxu0
        %v494 = vadd.f32 0.0, %v493
        %v495 = vpop.f32.mrf.mxu0
        %v496 = vadd.f32 0.0, %v495
        %497 = vmatmul.bf16.gmra.mxu0 %v303
        %v498 = vpop.f32.mrf.mxu0
        %v499 = vadd.f32 0.0, %v498
        %v500 = vpop.f32.mrf.mxu0
        %v501 = vadd.f32 0.0, %v500
        %502 = vmatmul.bf16.gmra.mxu0 %v304
        %v503 = vpop.f32.mrf.mxu0
        %v504 = vadd.f32 0.0, %v503
        %v505 = vpop.f32.mrf.mxu0
        %v506 = vadd.f32 0.0, %v505
        %507 = vmatmul.bf16.gmra.mxu0 %v305
        %v508 = vpop.f32.mrf.mxu0
        %v509 = vadd.f32 0.0, %v508
        %v510 = vpop.f32.mrf.mxu0
        %v511 = vadd.f32 0.0, %v510
        %512 = vmatmul.bf16.gmra.mxu0 %v306
        %v513 = vpop.f32.mrf.mxu0
        %v514 = vadd.f32 0.0, %v513
        %v515 = vpop.f32.mrf.mxu0
        %v516 = vadd.f32 0.0, %v515
        %517 = vdwg.mxu0
        %518 = vmatpush.bf16.msra.mxu0 %v439
        %519 = vmatpush.bf16.msra.mxu0 %v435
        %520 = vmatpush.bf16.msra.mxu0 %v431
        %521 = vmatpush.bf16.msra.mxu0 %v427
        %522 = vmatpush.bf16.msra.mxu0 %v423
        %523 = vmatpush.bf16.msra.mxu0 %v419
        %524 = vmatpush.bf16.msra.mxu0 %v415
        %525 = vmatpush.bf16.msra.mxu0 %v411
        %526 = vmatmul.bf16.gmra.mxu0 %v300
        %v527 = vpop.f32.mrf.mxu0
        %v528 = vadd.f32 0.0, %v527
        %v529 = vpop.f32.mrf.mxu0
        %v530 = vadd.f32 0.0, %v529
        %531 = vmatmul.bf16.gmra.mxu0 %v301
        %v532 = vpop.f32.mrf.mxu0
        %v533 = vadd.f32 0.0, %v532
        %v534 = vpop.f32.mrf.mxu0
        %v535 = vadd.f32 0.0, %v534
        %536 = vmatmul.bf16.gmra.mxu0 %v302
        %v537 = vpop.f32.mrf.mxu0
        %v538 = vadd.f32 0.0, %v537
        %v539 = vpop.f32.mrf.mxu0
        %v540 = vadd.f32 0.0, %v539
        %541 = vmatmul.bf16.gmra.mxu0 %v303
        %v542 = vpop.f32.mrf.mxu0
        %v543 = vadd.f32 0.0, %v542
        %v544 = vpop.f32.mrf.mxu0
        %v545 = vadd.f32 0.0, %v544
        %546 = vmatmul.bf16.gmra.mxu0 %v304
        %v547 = vpop.f32.mrf.mxu0
        %v548 = vadd.f32 0.0, %v547
        %v549 = vpop.f32.mrf.mxu0
        %v550 = vadd.f32 0.0, %v549
        %551 = vmatmul.bf16.gmra.mxu0 %v305
        %v552 = vpop.f32.mrf.mxu0
        %v553 = vadd.f32 0.0, %v552
        %v554 = vpop.f32.mrf.mxu0
        %v555 = vadd.f32 0.0, %v554
        %556 = vmatmul.bf16.gmra.mxu0 %v306
        %v557 = vpop.f32.mrf.mxu0
        %v558 = vadd.f32 0.0, %v557
        %v559 = vpop.f32.mrf.mxu0
        %v560 = vadd.f32 0.0, %v559
        %561 = vdwg.mxu0
        %562 = vmatpush.bf16.msra.mxu0 %v440
        %563 = vmatpush.bf16.msra.mxu0 %v436
        %564 = vmatpush.bf16.msra.mxu0 %v432
        %565 = vmatpush.bf16.msra.mxu0 %v428
        %566 = vmatpush.bf16.msra.mxu0 %v424
        %567 = vmatpush.bf16.msra.mxu0 %v420
        %568 = vmatpush.bf16.msra.mxu0 %v416
        %569 = vmatpush.bf16.msra.mxu0 %v412
        %570 = vmatmul.bf16.gmra.mxu0 %v300
        %v571 = vpop.f32.mrf.mxu0
        %v572 = vadd.f32 0.0, %v571
        %v573 = vpop.f32.mrf.mxu0
        %v574 = vadd.f32 0.0, %v573
        %575 = vmatmul.bf16.gmra.mxu0 %v301
        %v576 = vpop.f32.mrf.mxu0
        %v577 = vadd.f32 0.0, %v576
        %v578 = vpop.f32.mrf.mxu0
        %v579 = vadd.f32 0.0, %v578
        %580 = vmatmul.bf16.gmra.mxu0 %v302
        %v581 = vpop.f32.mrf.mxu0
        %v582 = vadd.f32 0.0, %v581
        %v583 = vpop.f32.mrf.mxu0
        %v584 = vadd.f32 0.0, %v583
        %585 = vmatmul.bf16.gmra.mxu0 %v303
        %v586 = vpop.f32.mrf.mxu0
        %v587 = vadd.f32 0.0, %v586
        %v588 = vpop.f32.mrf.mxu0
        %v589 = vadd.f32 0.0, %v588
        %590 = vmatmul.bf16.gmra.mxu0 %v304
        %v591 = vpop.f32.mrf.mxu0
        %v592 = vadd.f32 0.0, %v591
        %v593 = vpop.f32.mrf.mxu0
        %v594 = vadd.f32 0.0, %v593
        %595 = vmatmul.bf16.gmra.mxu0 %v305
        %v596 = vpop.f32.mrf.mxu0
        %v597 = vadd.f32 0.0, %v596
        %v598 = vpop.f32.mrf.mxu0
        %v599 = vadd.f32 0.0, %v598
        %600 = vmatmul.bf16.gmra.mxu0 %v306
        %v601 = vpop.f32.mrf.mxu0
        %v602 = vadd.f32 0.0, %v601
        %v603 = vpop.f32.mrf.mxu0
        %v604 = vadd.f32 0.0, %v603
        %605 = vdwg.mxu0
        %606 = vmatpush.bf16.msra.mxu0 %v441
        %607 = vmatpush.bf16.msra.mxu0 %v437
        %608 = vmatpush.bf16.msra.mxu0 %v433
        %609 = vmatpush.bf16.msra.mxu0 %v429
        %610 = vmatpush.bf16.msra.mxu0 %v425
        %611 = vmatpush.bf16.msra.mxu0 %v421
        %612 = vmatpush.bf16.msra.mxu0 %v417
        %613 = vmatpush.bf16.msra.mxu0 %v413
        %614 = vmatmul.bf16.gmra.mxu0 %v300
        %v615 = vpop.f32.mrf.mxu0
        %v616 = vadd.f32 0.0, %v615
        %v617 = vpop.f32.mrf.mxu0
        %v618 = vadd.f32 0.0, %v617
        %619 = vmatmul.bf16.gmra.mxu0 %v301
        %v620 = vpop.f32.mrf.mxu0
        %v621 = vadd.f32 0.0, %v620
        %v622 = vpop.f32.mrf.mxu0
        %v623 = vadd.f32 0.0, %v622
        %624 = vmatmul.bf16.gmra.mxu0 %v302
        %v625 = vpop.f32.mrf.mxu0
        %v626 = vadd.f32 0.0, %v625
        %v627 = vpop.f32.mrf.mxu0
        %v628 = vadd.f32 0.0, %v627
        %629 = vmatmul.bf16.gmra.mxu0 %v303
        %v630 = vpop.f32.mrf.mxu0
        %v631 = vadd.f32 0.0, %v630
        %v632 = vpop.f32.mrf.mxu0
        %v633 = vadd.f32 0.0, %v632
        %634 = vmatmul.bf16.gmra.mxu0 %v304
        %v635 = vpop.f32.mrf.mxu0
        %v636 = vadd.f32 0.0, %v635
        %v637 = vpop.f32.mrf.mxu0
        %v638 = vadd.f32 0.0, %v637
        %639 = vmatmul.bf16.gmra.mxu0 %v305
        %v640 = vpop.f32.mrf.mxu0
        %v641 = vadd.f32 0.0, %v640
        %v642 = vpop.f32.mrf.mxu0
        %v643 = vadd.f32 0.0, %v642
        %644 = vmatmul.bf16.gmra.mxu0 %v306
        %v645 = vpop.f32.mrf.mxu0
        %v646 = vadd.f32 0.0, %v645
        %v647 = vpop.f32.mrf.mxu0
        %v648 = vadd.f32 0.0, %v647
        %649 = vdwg.mxu0
        %v650 = vxor.u32 %v484, 2147483648
        %v651 = vxor.u32 %v528, 2147483648
        %v652 = vxor.u32 %v486, 2147483648
        %v653 = vxor.u32 %v530, 2147483648
        %v654 = vxor.u32 %v489, 2147483648
        %v655 = vxor.u32 %v533, 2147483648
        %v656 = vxor.u32 %v491, 2147483648
        %v657 = vxor.u32 %v535, 2147483648
        %v658 = vxor.u32 %v494, 2147483648
        %v659 = vxor.u32 %v538, 2147483648
        %v660 = vxor.u32 %v496, 2147483648
        %v661 = vxor.u32 %v540, 2147483648
        %v662 = vxor.u32 %v499, 2147483648
        %v663 = vxor.u32 %v543, 2147483648
        %v664 = vxor.u32 %v501, 2147483648
        %v665 = vxor.u32 %v545, 2147483648
        %v666 = vxor.u32 %v504, 2147483648
        %v667 = vxor.u32 %v548, 2147483648
        %v668 = vxor.u32 %v506, 2147483648
        %v669 = vxor.u32 %v550, 2147483648
        %v670 = vxor.u32 %v509, 2147483648
        %v671 = vxor.u32 %v553, 2147483648
        %v672 = vxor.u32 %v511, 2147483648
        %v673 = vxor.u32 %v555, 2147483648
        %v674 = vxor.u32 %v514, 2147483648
        %v675 = vxor.u32 %v558, 2147483648
        %v676 = vxor.u32 %v516, 2147483648
        %v677 = vxor.u32 %v560, 2147483648
        %v678 = vmul.f32 %v650, 1.442695
        %v679 = vpow.pop %v678
        %v680 = vmul.f32 %v651, 1.442695
        %v681 = vpow.pop %v680
        %v682 = vmul.f32 %v652, 1.442695
        %v683 = vpow.pop %v682
        %v684 = vmul.f32 %v653, 1.442695
        %v685 = vpow.pop %v684
        %v686 = vmul.f32 %v654, 1.442695
        %v687 = vpow.pop %v686
        %v688 = vmul.f32 %v655, 1.442695
        %v689 = vpow.pop %v688
        %v690 = vmul.f32 %v656, 1.442695
        %v691 = vpow.pop %v690
        %v692 = vmul.f32 %v657, 1.442695
        %v693 = vpow.pop %v692
        %v694 = vmul.f32 %v658, 1.442695
        %v695 = vpow.pop %v694
        %v696 = vmul.f32 %v659, 1.442695
        %v697 = vpow.pop %v696
        %v698 = vmul.f32 %v660, 1.442695
        %v699 = vpow.pop %v698
        %v700 = vmul.f32 %v661, 1.442695
        %v701 = vpow.pop %v700
        %v702 = vmul.f32 %v662, 1.442695
        %v703 = vpow.pop %v702
        %v704 = vmul.f32 %v663, 1.442695
        %v705 = vpow.pop %v704
        %v706 = vmul.f32 %v664, 1.442695
        %v707 = vpow.pop %v706
        %v708 = vmul.f32 %v665, 1.442695
        %v709 = vpow.pop %v708
        %v710 = vmul.f32 %v666, 1.442695
        %v711 = vpow.pop %v710
        %v712 = vmul.f32 %v667, 1.442695
        %v713 = vpow.pop %v712
        %v714 = vmul.f32 %v668, 1.442695
        %v715 = vpow.pop %v714
        %v716 = vmul.f32 %v669, 1.442695
        %v717 = vpow.pop %v716
        %v718 = vmul.f32 %v670, 1.442695
        %v719 = vpow.pop %v718
        %v720 = vmul.f32 %v671, 1.442695
        %v721 = vpow.pop %v720
        %v722 = vmul.f32 %v672, 1.442695
        %v723 = vpow.pop %v722
        %v724 = vmul.f32 %v673, 1.442695
        %v725 = vpow.pop %v724
        %v726 = vmul.f32 %v674, 1.442695
        %v727 = vpow.pop %v726
        %v728 = vmul.f32 %v675, 1.442695
        %v729 = vpow.pop %v728
        %v730 = vmul.f32 %v676, 1.442695
        %v731 = vpow.pop %v730
        %v732 = vmul.f32 %v677, 1.442695
        %v733 = vpow.pop %v732
        %v734 = vadd.f32 %v679, 1.0
        %v735 = vadd.f32 %v681, 1.0
        %v736 = vadd.f32 %v683, 1.0
        %v737 = vadd.f32 %v685, 1.0
        %v738 = vadd.f32 %v687, 1.0
        %v739 = vadd.f32 %v689, 1.0
        %v740 = vadd.f32 %v691, 1.0
        %v741 = vadd.f32 %v693, 1.0
        %v742 = vadd.f32 %v695, 1.0
        %v743 = vadd.f32 %v697, 1.0
        %v744 = vadd.f32 %v699, 1.0
        %v745 = vadd.f32 %v701, 1.0
        %v746 = vadd.f32 %v703, 1.0
        %v747 = vadd.f32 %v705, 1.0
        %v748 = vadd.f32 %v707, 1.0
        %v749 = vadd.f32 %v709, 1.0
        %v750 = vadd.f32 %v711, 1.0
        %v751 = vadd.f32 %v713, 1.0
        %v752 = vadd.f32 %v715, 1.0
        %v753 = vadd.f32 %v717, 1.0
        %v754 = vadd.f32 %v719, 1.0
        %v755 = vadd.f32 %v721, 1.0
        %v756 = vadd.f32 %v723, 1.0
        %v757 = vadd.f32 %v725, 1.0
        %v758 = vadd.f32 %v727, 1.0
        %v759 = vadd.f32 %v729, 1.0
        %v760 = vadd.f32 %v731, 1.0
        %v761 = vadd.f32 %v733, 1.0
        %v762 = vrcp.pop %v734
        %v763 = vmul.f32 %v734, %v762
        %v764 = vsub.f32 1.0, %v763
        %v765 = vmul.f32 %v762, %v764
        %v766 = vadd.f32 %v762, %v765
        %vm767 = vweird.f32 %v734
        %vm768 = vweird.f32 %v762
        %vm769 = vmor %vm767, %vm768
        %v770 = vsel %vm769, %v762, %v766
        %v771 = vand.u32 2147483647, %v734
        %vm772 = vcmp.eq.f32.partialorder %v771, 8.507059e+37
        %v773 = vand.u32 %v734, 2147483648
        %v774 = vor.u32 1.1754944e-38, %v773
        %v775 = vsel %vm772, %v774, %v770
        %v776 = vmul.f32 1.0, %v775
        %v777 = vrcp.pop %v735
        %v778 = vmul.f32 %v735, %v777
        %v779 = vsub.f32 1.0, %v778
        %v780 = vmul.f32 %v777, %v779
        %v781 = vadd.f32 %v777, %v780
        %vm782 = vweird.f32 %v735
        %vm783 = vweird.f32 %v777
        %vm784 = vmor %vm782, %vm783
        %v785 = vsel %vm784, %v777, %v781
        %v786 = vand.u32 2147483647, %v735
        %vm787 = vcmp.eq.f32.partialorder %v786, 8.507059e+37
        %v788 = vand.u32 %v735, 2147483648
        %v789 = vor.u32 1.1754944e-38, %v788
        %v790 = vsel %vm787, %v789, %v785
        %v791 = vmul.f32 1.0, %v790
        %v792 = vrcp.pop %v736
        %v793 = vmul.f32 %v736, %v792
        %v794 = vsub.f32 1.0, %v793
        %v795 = vmul.f32 %v792, %v794
        %v796 = vadd.f32 %v792, %v795
        %vm797 = vweird.f32 %v736
        %vm798 = vweird.f32 %v792
        %vm799 = vmor %vm797, %vm798
        %v800 = vsel %vm799, %v792, %v796
        %v801 = vand.u32 2147483647, %v736
        %vm802 = vcmp.eq.f32.partialorder %v801, 8.507059e+37
        %v803 = vand.u32 %v736, 2147483648
        %v804 = vor.u32 1.1754944e-38, %v803
        %v805 = vsel %vm802, %v804, %v800
        %v806 = vmul.f32 1.0, %v805
        %v807 = vrcp.pop %v737
        %v808 = vmul.f32 %v737, %v807
        %v809 = vsub.f32 1.0, %v808
        %v810 = vmul.f32 %v807, %v809
        %v811 = vadd.f32 %v807, %v810
        %vm812 = vweird.f32 %v737
        %vm813 = vweird.f32 %v807
        %vm814 = vmor %vm812, %vm813
        %v815 = vsel %vm814, %v807, %v811
        %v816 = vand.u32 2147483647, %v737
        %vm817 = vcmp.eq.f32.partialorder %v816, 8.507059e+37
        %v818 = vand.u32 %v737, 2147483648
        %v819 = vor.u32 1.1754944e-38, %v818
        %v820 = vsel %vm817, %v819, %v815
        %v821 = vmul.f32 1.0, %v820
        %v822 = vrcp.pop %v738
        %v823 = vmul.f32 %v738, %v822
        %v824 = vsub.f32 1.0, %v823
        %v825 = vmul.f32 %v822, %v824
        %v826 = vadd.f32 %v822, %v825
        %vm827 = vweird.f32 %v738
        %vm828 = vweird.f32 %v822
        %vm829 = vmor %vm827, %vm828
        %v830 = vsel %vm829, %v822, %v826
        %v831 = vand.u32 2147483647, %v738
        %vm832 = vcmp.eq.f32.partialorder %v831, 8.507059e+37
        %v833 = vand.u32 %v738, 2147483648
        %v834 = vor.u32 1.1754944e-38, %v833
        %v835 = vsel %vm832, %v834, %v830
        %v836 = vmul.f32 1.0, %v835
        %v837 = vrcp.pop %v739
        %v838 = vmul.f32 %v739, %v837
        %v839 = vsub.f32 1.0, %v838
        %v840 = vmul.f32 %v837, %v839
        %v841 = vadd.f32 %v837, %v840
        %vm842 = vweird.f32 %v739
        %vm843 = vweird.f32 %v837
        %vm844 = vmor %vm842, %vm843
        %v845 = vsel %vm844, %v837, %v841
        %v846 = vand.u32 2147483647, %v739
        %vm847 = vcmp.eq.f32.partialorder %v846, 8.507059e+37
        %v848 = vand.u32 %v739, 2147483648
        %v849 = vor.u32 1.1754944e-38, %v848
        %v850 = vsel %vm847, %v849, %v845
        %v851 = vmul.f32 1.0, %v850
        %v852 = vrcp.pop %v740
        %v853 = vmul.f32 %v740, %v852
        %v854 = vsub.f32 1.0, %v853
        %v855 = vmul.f32 %v852, %v854
        %v856 = vadd.f32 %v852, %v855
        %vm857 = vweird.f32 %v740
        %vm858 = vweird.f32 %v852
        %vm859 = vmor %vm857, %vm858
        %v860 = vsel %vm859, %v852, %v856
        %v861 = vand.u32 2147483647, %v740
        %vm862 = vcmp.eq.f32.partialorder %v861, 8.507059e+37
        %v863 = vand.u32 %v740, 2147483648
        %v864 = vor.u32 1.1754944e-38, %v863
        %v865 = vsel %vm862, %v864, %v860
        %v866 = vmul.f32 1.0, %v865
        %v867 = vrcp.pop %v741
        %v868 = vmul.f32 %v741, %v867
        %v869 = vsub.f32 1.0, %v868
        %v870 = vmul.f32 %v867, %v869
        %v871 = vadd.f32 %v867, %v870
        %vm872 = vweird.f32 %v741
        %vm873 = vweird.f32 %v867
        %vm874 = vmor %vm872, %vm873
        %v875 = vsel %vm874, %v867, %v871
        %v876 = vand.u32 2147483647, %v741
        %vm877 = vcmp.eq.f32.partialorder %v876, 8.507059e+37
        %v878 = vand.u32 %v741, 2147483648
        %v879 = vor.u32 1.1754944e-38, %v878
        %v880 = vsel %vm877, %v879, %v875
        %v881 = vmul.f32 1.0, %v880
        %v882 = vrcp.pop %v742
        %v883 = vmul.f32 %v742, %v882
        %v884 = vsub.f32 1.0, %v883
        %v885 = vmul.f32 %v882, %v884
        %v886 = vadd.f32 %v882, %v885
        %vm887 = vweird.f32 %v742
        %vm888 = vweird.f32 %v882
        %vm889 = vmor %vm887, %vm888
        %v890 = vsel %vm889, %v882, %v886
        %v891 = vand.u32 2147483647, %v742
        %vm892 = vcmp.eq.f32.partialorder %v891, 8.507059e+37
        %v893 = vand.u32 %v742, 2147483648
        %v894 = vor.u32 1.1754944e-38, %v893
        %v895 = vsel %vm892, %v894, %v890
        %v896 = vmul.f32 1.0, %v895
        %v897 = vrcp.pop %v743
        %v898 = vmul.f32 %v743, %v897
        %v899 = vsub.f32 1.0, %v898
        %v900 = vmul.f32 %v897, %v899
        %v901 = vadd.f32 %v897, %v900
        %vm902 = vweird.f32 %v743
        %vm903 = vweird.f32 %v897
        %vm904 = vmor %vm902, %vm903
        %v905 = vsel %vm904, %v897, %v901
        %v906 = vand.u32 2147483647, %v743
        %vm907 = vcmp.eq.f32.partialorder %v906, 8.507059e+37
        %v908 = vand.u32 %v743, 2147483648
        %v909 = vor.u32 1.1754944e-38, %v908
        %v910 = vsel %vm907, %v909, %v905
        %v911 = vmul.f32 1.0, %v910
        %v912 = vrcp.pop %v744
        %v913 = vmul.f32 %v744, %v912
        %v914 = vsub.f32 1.0, %v913
        %v915 = vmul.f32 %v912, %v914
        %v916 = vadd.f32 %v912, %v915
        %vm917 = vweird.f32 %v744
        %vm918 = vweird.f32 %v912
        %vm919 = vmor %vm917, %vm918
        %v920 = vsel %vm919, %v912, %v916
        %v921 = vand.u32 2147483647, %v744
        %vm922 = vcmp.eq.f32.partialorder %v921, 8.507059e+37
        %v923 = vand.u32 %v744, 2147483648
        %v924 = vor.u32 1.1754944e-38, %v923
        %v925 = vsel %vm922, %v924, %v920
        %v926 = vmul.f32 1.0, %v925
        %v927 = vrcp.pop %v745
        %v928 = vmul.f32 %v745, %v927
        %v929 = vsub.f32 1.0, %v928
        %v930 = vmul.f32 %v927, %v929
        %v931 = vadd.f32 %v927, %v930
        %vm932 = vweird.f32 %v745
        %vm933 = vweird.f32 %v927
        %vm934 = vmor %vm932, %vm933
        %v935 = vsel %vm934, %v927, %v931
        %v936 = vand.u32 2147483647, %v745
        %vm937 = vcmp.eq.f32.partialorder %v936, 8.507059e+37
        %v938 = vand.u32 %v745, 2147483648
        %v939 = vor.u32 1.1754944e-38, %v938
        %v940 = vsel %vm937, %v939, %v935
        %v941 = vmul.f32 1.0, %v940
        %v942 = vrcp.pop %v746
        %v943 = vmul.f32 %v746, %v942
        %v944 = vsub.f32 1.0, %v943
        %v945 = vmul.f32 %v942, %v944
        %v946 = vadd.f32 %v942, %v945
        %vm947 = vweird.f32 %v746
        %vm948 = vweird.f32 %v942
        %vm949 = vmor %vm947, %vm948
        %v950 = vsel %vm949, %v942, %v946
        %v951 = vand.u32 2147483647, %v746
        %vm952 = vcmp.eq.f32.partialorder %v951, 8.507059e+37
        %v953 = vand.u32 %v746, 2147483648
        %v954 = vor.u32 1.1754944e-38, %v953
        %v955 = vsel %vm952, %v954, %v950
        %v956 = vmul.f32 1.0, %v955
        %v957 = vrcp.pop %v747
        %v958 = vmul.f32 %v747, %v957
        %v959 = vsub.f32 1.0, %v958
        %v960 = vmul.f32 %v957, %v959
        %v961 = vadd.f32 %v957, %v960
        %vm962 = vweird.f32 %v747
        %vm963 = vweird.f32 %v957
        %vm964 = vmor %vm962, %vm963
        %v965 = vsel %vm964, %v957, %v961
        %v966 = vand.u32 2147483647, %v747
        %vm967 = vcmp.eq.f32.partialorder %v966, 8.507059e+37
        %v968 = vand.u32 %v747, 2147483648
        %v969 = vor.u32 1.1754944e-38, %v968
        %v970 = vsel %vm967, %v969, %v965
        %v971 = vmul.f32 1.0, %v970
        %v972 = vrcp.pop %v748
        %v973 = vmul.f32 %v748, %v972
        %v974 = vsub.f32 1.0, %v973
        %v975 = vmul.f32 %v972, %v974
        %v976 = vadd.f32 %v972, %v975
        %vm977 = vweird.f32 %v748
        %vm978 = vweird.f32 %v972
        %vm979 = vmor %vm977, %vm978
        %v980 = vsel %vm979, %v972, %v976
        %v981 = vand.u32 2147483647, %v748
        %vm982 = vcmp.eq.f32.partialorder %v981, 8.507059e+37
        %v983 = vand.u32 %v748, 2147483648
        %v984 = vor.u32 1.1754944e-38, %v983
        %v985 = vsel %vm982, %v984, %v980
        %v986 = vmul.f32 1.0, %v985
        %v987 = vrcp.pop %v749
        %v988 = vmul.f32 %v749, %v987
        %v989 = vsub.f32 1.0, %v988
        %v990 = vmul.f32 %v987, %v989
        %v991 = vadd.f32 %v987, %v990
        %vm992 = vweird.f32 %v749
        %vm993 = vweird.f32 %v987
        %vm994 = vmor %vm992, %vm993
        %v995 = vsel %vm994, %v987, %v991
        %v996 = vand.u32 2147483647, %v749
        %vm997 = vcmp.eq.f32.partialorder %v996, 8.507059e+37
        %v998 = vand.u32 %v749, 2147483648
        %v999 = vor.u32 1.1754944e-38, %v998
        %v1000 = vsel %vm997, %v999, %v995
        %v1001 = vmul.f32 1.0, %v1000
        %v1002 = vrcp.pop %v750
        %v1003 = vmul.f32 %v750, %v1002
        %v1004 = vsub.f32 1.0, %v1003
        %v1005 = vmul.f32 %v1002, %v1004
        %v1006 = vadd.f32 %v1002, %v1005
        %vm1007 = vweird.f32 %v750
        %vm1008 = vweird.f32 %v1002
        %vm1009 = vmor %vm1007, %vm1008
        %v1010 = vsel %vm1009, %v1002, %v1006
        %v1011 = vand.u32 2147483647, %v750
        %vm1012 = vcmp.eq.f32.partialorder %v1011, 8.507059e+37
        %v1013 = vand.u32 %v750, 2147483648
        %v1014 = vor.u32 1.1754944e-38, %v1013
        %v1015 = vsel %vm1012, %v1014, %v1010
        %v1016 = vmul.f32 1.0, %v1015
        %v1017 = vrcp.pop %v751
        %v1018 = vmul.f32 %v751, %v1017
        %v1019 = vsub.f32 1.0, %v1018
        %v1020 = vmul.f32 %v1017, %v1019
        %v1021 = vadd.f32 %v1017, %v1020
        %vm1022 = vweird.f32 %v751
        %vm1023 = vweird.f32 %v1017
        %vm1024 = vmor %vm1022, %vm1023
        %v1025 = vsel %vm1024, %v1017, %v1021
        %v1026 = vand.u32 2147483647, %v751
        %vm1027 = vcmp.eq.f32.partialorder %v1026, 8.507059e+37
        %v1028 = vand.u32 %v751, 2147483648
        %v1029 = vor.u32 1.1754944e-38, %v1028
        %v1030 = vsel %vm1027, %v1029, %v1025
        %v1031 = vmul.f32 1.0, %v1030
        %v1032 = vrcp.pop %v752
        %v1033 = vmul.f32 %v752, %v1032
        %v1034 = vsub.f32 1.0, %v1033
        %v1035 = vmul.f32 %v1032, %v1034
        %v1036 = vadd.f32 %v1032, %v1035
        %vm1037 = vweird.f32 %v752
        %vm1038 = vweird.f32 %v1032
        %vm1039 = vmor %vm1037, %vm1038
        %v1040 = vsel %vm1039, %v1032, %v1036
        %v1041 = vand.u32 2147483647, %v752
        %vm1042 = vcmp.eq.f32.partialorder %v1041, 8.507059e+37
        %v1043 = vand.u32 %v752, 2147483648
        %v1044 = vor.u32 1.1754944e-38, %v1043
        %v1045 = vsel %vm1042, %v1044, %v1040
        %v1046 = vmul.f32 1.0, %v1045
        %v1047 = vrcp.pop %v753
        %v1048 = vmul.f32 %v753, %v1047
        %v1049 = vsub.f32 1.0, %v1048
        %v1050 = vmul.f32 %v1047, %v1049
        %v1051 = vadd.f32 %v1047, %v1050
        %vm1052 = vweird.f32 %v753
        %vm1053 = vweird.f32 %v1047
        %vm1054 = vmor %vm1052, %vm1053
        %v1055 = vsel %vm1054, %v1047, %v1051
        %v1056 = vand.u32 2147483647, %v753
        %vm1057 = vcmp.eq.f32.partialorder %v1056, 8.507059e+37
        %v1058 = vand.u32 %v753, 2147483648
        %v1059 = vor.u32 1.1754944e-38, %v1058
        %v1060 = vsel %vm1057, %v1059, %v1055
        %v1061 = vmul.f32 1.0, %v1060
        %v1062 = vrcp.pop %v754
        %v1063 = vmul.f32 %v754, %v1062
        %v1064 = vsub.f32 1.0, %v1063
        %v1065 = vmul.f32 %v1062, %v1064
        %v1066 = vadd.f32 %v1062, %v1065
        %vm1067 = vweird.f32 %v754
        %vm1068 = vweird.f32 %v1062
        %vm1069 = vmor %vm1067, %vm1068
        %v1070 = vsel %vm1069, %v1062, %v1066
        %v1071 = vand.u32 2147483647, %v754
        %vm1072 = vcmp.eq.f32.partialorder %v1071, 8.507059e+37
        %v1073 = vand.u32 %v754, 2147483648
        %v1074 = vor.u32 1.1754944e-38, %v1073
        %v1075 = vsel %vm1072, %v1074, %v1070
        %v1076 = vmul.f32 1.0, %v1075
        %v1077 = vrcp.pop %v755
        %v1078 = vmul.f32 %v755, %v1077
        %v1079 = vsub.f32 1.0, %v1078
        %v1080 = vmul.f32 %v1077, %v1079
        %v1081 = vadd.f32 %v1077, %v1080
        %vm1082 = vweird.f32 %v755
        %vm1083 = vweird.f32 %v1077
        %vm1084 = vmor %vm1082, %vm1083
        %v1085 = vsel %vm1084, %v1077, %v1081
        %v1086 = vand.u32 2147483647, %v755
        %vm1087 = vcmp.eq.f32.partialorder %v1086, 8.507059e+37
        %v1088 = vand.u32 %v755, 2147483648
        %v1089 = vor.u32 1.1754944e-38, %v1088
        %v1090 = vsel %vm1087, %v1089, %v1085
        %v1091 = vmul.f32 1.0, %v1090
        %v1092 = vrcp.pop %v756
        %v1093 = vmul.f32 %v756, %v1092
        %v1094 = vsub.f32 1.0, %v1093
        %v1095 = vmul.f32 %v1092, %v1094
        %v1096 = vadd.f32 %v1092, %v1095
        %vm1097 = vweird.f32 %v756
        %vm1098 = vweird.f32 %v1092
        %vm1099 = vmor %vm1097, %vm1098
        %v1100 = vsel %vm1099, %v1092, %v1096
        %v1101 = vand.u32 2147483647, %v756
        %vm1102 = vcmp.eq.f32.partialorder %v1101, 8.507059e+37
        %v1103 = vand.u32 %v756, 2147483648
        %v1104 = vor.u32 1.1754944e-38, %v1103
        %v1105 = vsel %vm1102, %v1104, %v1100
        %v1106 = vmul.f32 1.0, %v1105
        %v1107 = vrcp.pop %v757
        %v1108 = vmul.f32 %v757, %v1107
        %v1109 = vsub.f32 1.0, %v1108
        %v1110 = vmul.f32 %v1107, %v1109
        %v1111 = vadd.f32 %v1107, %v1110
        %vm1112 = vweird.f32 %v757
        %vm1113 = vweird.f32 %v1107
        %vm1114 = vmor %vm1112, %vm1113
        %v1115 = vsel %vm1114, %v1107, %v1111
        %v1116 = vand.u32 2147483647, %v757
        %vm1117 = vcmp.eq.f32.partialorder %v1116, 8.507059e+37
        %v1118 = vand.u32 %v757, 2147483648
        %v1119 = vor.u32 1.1754944e-38, %v1118
        %v1120 = vsel %vm1117, %v1119, %v1115
        %v1121 = vmul.f32 1.0, %v1120
        %v1122 = vrcp.pop %v758
        %v1123 = vmul.f32 %v758, %v1122
        %v1124 = vsub.f32 1.0, %v1123
        %v1125 = vmul.f32 %v1122, %v1124
        %v1126 = vadd.f32 %v1122, %v1125
        %vm1127 = vweird.f32 %v758
        %vm1128 = vweird.f32 %v1122
        %vm1129 = vmor %vm1127, %vm1128
        %v1130 = vsel %vm1129, %v1122, %v1126
        %v1131 = vand.u32 2147483647, %v758
        %vm1132 = vcmp.eq.f32.partialorder %v1131, 8.507059e+37
        %v1133 = vand.u32 %v758, 2147483648
        %v1134 = vor.u32 1.1754944e-38, %v1133
        %v1135 = vsel %vm1132, %v1134, %v1130
        %v1136 = vmul.f32 1.0, %v1135
        %v1137 = vrcp.pop %v759
        %v1138 = vmul.f32 %v759, %v1137
        %v1139 = vsub.f32 1.0, %v1138
        %v1140 = vmul.f32 %v1137, %v1139
        %v1141 = vadd.f32 %v1137, %v1140
        %vm1142 = vweird.f32 %v759
        %vm1143 = vweird.f32 %v1137
        %vm1144 = vmor %vm1142, %vm1143
        %v1145 = vsel %vm1144, %v1137, %v1141
        %v1146 = vand.u32 2147483647, %v759
        %vm1147 = vcmp.eq.f32.partialorder %v1146, 8.507059e+37
        %v1148 = vand.u32 %v759, 2147483648
        %v1149 = vor.u32 1.1754944e-38, %v1148
        %v1150 = vsel %vm1147, %v1149, %v1145
        %v1151 = vmul.f32 1.0, %v1150
        %v1152 = vrcp.pop %v760
        %v1153 = vmul.f32 %v760, %v1152
        %v1154 = vsub.f32 1.0, %v1153
        %v1155 = vmul.f32 %v1152, %v1154
        %v1156 = vadd.f32 %v1152, %v1155
        %vm1157 = vweird.f32 %v760
        %vm1158 = vweird.f32 %v1152
        %vm1159 = vmor %vm1157, %vm1158
        %v1160 = vsel %vm1159, %v1152, %v1156
        %v1161 = vand.u32 2147483647, %v760
        %vm1162 = vcmp.eq.f32.partialorder %v1161, 8.507059e+37
        %v1163 = vand.u32 %v760, 2147483648
        %v1164 = vor.u32 1.1754944e-38, %v1163
        %v1165 = vsel %vm1162, %v1164, %v1160
        %v1166 = vmul.f32 1.0, %v1165
        %v1167 = vrcp.pop %v761
        %v1168 = vmul.f32 %v761, %v1167
        %v1169 = vsub.f32 1.0, %v1168
        %v1170 = vmul.f32 %v1167, %v1169
        %v1171 = vadd.f32 %v1167, %v1170
        %vm1172 = vweird.f32 %v761
        %vm1173 = vweird.f32 %v1167
        %vm1174 = vmor %vm1172, %vm1173
        %v1175 = vsel %vm1174, %v1167, %v1171
        %v1176 = vand.u32 2147483647, %v761
        %vm1177 = vcmp.eq.f32.partialorder %v1176, 8.507059e+37
        %v1178 = vand.u32 %v761, 2147483648
        %v1179 = vor.u32 1.1754944e-38, %v1178
        %v1180 = vsel %vm1177, %v1179, %v1175
        %v1181 = vmul.f32 1.0, %v1180
        %v1182 = vmul.f32 %v484, %v776
        %v1183 = vmul.f32 %v528, %v791
        %v1184 = vmul.f32 %v486, %v806
        %v1185 = vmul.f32 %v530, %v821
        %v1186 = vmul.f32 %v489, %v836
        %v1187 = vmul.f32 %v533, %v851
        %v1188 = vmul.f32 %v491, %v866
        %v1189 = vmul.f32 %v535, %v881
        %v1190 = vmul.f32 %v494, %v896
        %v1191 = vmul.f32 %v538, %v911
        %v1192 = vmul.f32 %v496, %v926
        %v1193 = vmul.f32 %v540, %v941
        %v1194 = vmul.f32 %v499, %v956
        %v1195 = vmul.f32 %v543, %v971
        %v1196 = vmul.f32 %v501, %v986
        %v1197 = vmul.f32 %v545, %v1001
        %v1198 = vmul.f32 %v504, %v1016
        %v1199 = vmul.f32 %v548, %v1031
        %v1200 = vmul.f32 %v506, %v1046
        %v1201 = vmul.f32 %v550, %v1061
        %v1202 = vmul.f32 %v509, %v1076
        %v1203 = vmul.f32 %v553, %v1091
        %v1204 = vmul.f32 %v511, %v1106
        %v1205 = vmul.f32 %v555, %v1121
        %v1206 = vmul.f32 %v514, %v1136
        %v1207 = vmul.f32 %v558, %v1151
        %v1208 = vmul.f32 %v516, %v1166
        %v1209 = vmul.f32 %v560, %v1181
        %v1210 = vmul.f32 %v1182, %v572
        %v1211 = vmul.f32 %v1183, %v616
        %v1212 = vmul.f32 %v1184, %v574
        %v1213 = vmul.f32 %v1185, %v618
        %v1214 = vmul.f32 %v1186, %v577
        %v1215 = vmul.f32 %v1187, %v621
        %v1216 = vmul.f32 %v1188, %v579
        %v1217 = vmul.f32 %v1189, %v623
        %v1218 = vmul.f32 %v1190, %v582
        %v1219 = vmul.f32 %v1191, %v626
        %v1220 = vmul.f32 %v1192, %v584
        %v1221 = vmul.f32 %v1193, %v628
        %v1222 = vmul.f32 %v1194, %v587
        %v1223 = vmul.f32 %v1195, %v631
        %v1224 = vmul.f32 %v1196, %v589
        %v1225 = vmul.f32 %v1197, %v633
        %v1226 = vmul.f32 %v1198, %v592
        %v1227 = vmul.f32 %v1199, %v636
        %v1228 = vmul.f32 %v1200, %v594
        %v1229 = vmul.f32 %v1201, %v638
        %v1230 = vmul.f32 %v1202, %v597
        %v1231 = vmul.f32 %v1203, %v641
        %v1232 = vmul.f32 %v1204, %v599
        %v1233 = vmul.f32 %v1205, %v643
        %v1234 = vmul.f32 %v1206, %v602
        %v1235 = vmul.f32 %v1207, %v646
        %v1236 = vmul.f32 %v1208, %v604
        %v1237 = vmul.f32 %v1209, %v648
        %v1238 = vpack.c.bf16 %v1212, %v1210
        %v1239 = vpack.c.bf16 %v1213, %v1211
        %v1240 = vpack.c.bf16 %v1216, %v1214
        %v1241 = vpack.c.bf16 %v1217, %v1215
        %v1242 = vpack.c.bf16 %v1220, %v1218
        %v1243 = vpack.c.bf16 %v1221, %v1219
        %v1244 = vpack.c.bf16 %v1224, %v1222
        %v1245 = vpack.c.bf16 %v1225, %v1223
        %v1246 = vpack.c.bf16 %v1228, %v1226
        %v1247 = vpack.c.bf16 %v1229, %v1227
        %v1248 = vpack.c.bf16 %v1232, %v1230
        %v1249 = vpack.c.bf16 %v1233, %v1231
        %v1250 = vpack.c.bf16 %v1236, %v1234
        %v1251 = vpack.c.bf16 %v1237, %v1235
        %v1252 = vld [vmem:[#allocation7] sm:$0xf]
        %v1253 = vld [vmem:[#allocation7 + $0x4] sm:$0xf]
        %v1254 = vld [vmem:[#allocation7 + $0x8] sm:$0xf]
        %v1255 = vld [vmem:[#allocation7 + $0xc] sm:$0xf]
        %v1256 = vld [vmem:[#allocation7 + $0x10] sm:$0xf]
        %v1257 = vld [vmem:[#allocation7 + $0x14] sm:$0xf]
        %v1258 = vld [vmem:[#allocation7 + $0x18] sm:$0xf]
        %v1259 = vld [vmem:[#allocation7 + $0x1c] sm:$0xf]
        %v1260 = vld [vmem:[#allocation7 + $0x20] sm:$0xf]
        %v1261 = vld [vmem:[#allocation7 + $0x24] sm:$0xf]
        %v1262 = vld [vmem:[#allocation7 + $0x28] sm:$0xf]
        %v1263 = vld [vmem:[#allocation7 + $0x2c] sm:$0xf]
        %v1264 = vld [vmem:[#allocation7 + $0x30] sm:$0xf]
        %v1265 = vld [vmem:[#allocation7 + $0x34] sm:$0xf]
        %v1266 = vld [vmem:[#allocation7 + $0x38] sm:$0xf]
        %v1267 = vld [vmem:[#allocation7 + $0x3c] sm:$0xf]
        %v1268 = vld [vmem:[#allocation7 + $0x40] sm:$0xf]
        %v1269 = vld [vmem:[#allocation7 + $0x44] sm:$0xf]
        %v1270 = vld [vmem:[#allocation7 + $0x48] sm:$0xf]
        %v1271 = vld [vmem:[#allocation7 + $0x4c] sm:$0xf]
        %v1272 = vld [vmem:[#allocation7 + $0x50] sm:$0xf]
        %v1273 = vld [vmem:[#allocation7 + $0x54] sm:$0xf]
        %v1274 = vld [vmem:[#allocation7 + $0x58] sm:$0xf]
        %v1275 = vld [vmem:[#allocation7 + $0x5c] sm:$0xf]
        %v1276 = vld [vmem:[#allocation7 + $0x60] sm:$0xf]
        %v1277 = vld [vmem:[#allocation7 + $0x64] sm:$0xf]
        %v1278 = vld [vmem:[#allocation7 + $0x68] sm:$0xf]
        %v1279 = vld [vmem:[#allocation7 + $0x6c] sm:$0xf]
        %v1280 = vld [vmem:[#allocation7 + $0x70] sm:$0xf]
        %v1281 = vld [vmem:[#allocation7 + $0x74] sm:$0xf]
        %v1282 = vld [vmem:[#allocation7 + $0x78] sm:$0xf]
        %v1283 = vld [vmem:[#allocation7 + $0x7c] sm:$0xf]
        %v1284 = vld [vmem:[#allocation5 + $0x10] sm:$0xff]
        %v1285 = vld [vmem:[#allocation5 + $0x18] sm:$0xff]
        %v1286 = vld [vmem:[#allocation5 + $0x30] sm:$0xff]
        %v1287 = vld [vmem:[#allocation5 + $0x38] sm:$0xff]
        %v1288 = vld [vmem:[#allocation5 + $0x50] sm:$0xff]
        %v1289 = vld [vmem:[#allocation5 + $0x58] sm:$0xff]
        %v1290 = vld [vmem:[#allocation5 + $0x70] sm:$0xff]
        %v1291 = vld [vmem:[#allocation5 + $0x78] sm:$0xff]
        %v1292 = vld [vmem:[#allocation5 + $0x90] sm:$0xff]
        %v1293 = vld [vmem:[#allocation5 + $0x98] sm:$0xff]
        %v1294 = vld [vmem:[#allocation5 + $0xb0] sm:$0xff]
        %v1295 = vld [vmem:[#allocation5 + $0xb8] sm:$0xff]
        %v1296 = vld [vmem:[#allocation5 + $0xd0] sm:$0xff]
        %v1297 = vld [vmem:[#allocation5 + $0xd8] sm:$0xff]
        %v1298 = vld [vmem:[#allocation5 + $0xf0] sm:$0xff]
        %v1299 = vld [vmem:[#allocation5 + $0xf8] sm:$0xff]
        %v1300 = vld [vmem:[#allocation5 + $0x110] sm:$0xff]
        %v1301 = vld [vmem:[#allocation5 + $0x118] sm:$0xff]
        %v1302 = vld [vmem:[#allocation5 + $0x130] sm:$0xff]
        %v1303 = vld [vmem:[#allocation5 + $0x138] sm:$0xff]
        %v1304 = vld [vmem:[#allocation5 + $0x150] sm:$0xff]
        %v1305 = vld [vmem:[#allocation5 + $0x158] sm:$0xff]
        %v1306 = vld [vmem:[#allocation5 + $0x170] sm:$0xff]
        %v1307 = vld [vmem:[#allocation5 + $0x178] sm:$0xff]
        %v1308 = vld [vmem:[#allocation5 + $0x190] sm:$0xff]
        %v1309 = vld [vmem:[#allocation5 + $0x198] sm:$0xff]
        %v1310 = vld [vmem:[#allocation5 + $0x1b0] sm:$0xff]
        %v1311 = vld [vmem:[#allocation5 + $0x1b8] sm:$0xff]
        %v1312 = vld [vmem:[#allocation5 + $0x1d0] sm:$0xff]
        %v1313 = vld [vmem:[#allocation5 + $0x1d8] sm:$0xff]
        %v1314 = vld [vmem:[#allocation5 + $0x1f0] sm:$0xff]
        %v1315 = vld [vmem:[#allocation5 + $0x1f8] sm:$0xff]
        %v1348 = vunpack.c.l.b16 %v1284
        %v1349 = vunpack.c.h.b16 %v1284
        %v1350 = vunpack.c.l.b16 %v1285
        %v1351 = vunpack.c.h.b16 %v1285
        %v1352 = vunpack.c.l.b16 %v1286
        %v1353 = vunpack.c.h.b16 %v1286
        %v1354 = vunpack.c.l.b16 %v1287
        %v1355 = vunpack.c.h.b16 %v1287
        %v1356 = vunpack.c.l.b16 %v1288
        %v1357 = vunpack.c.h.b16 %v1288
        %v1358 = vunpack.c.l.b16 %v1289
        %v1359 = vunpack.c.h.b16 %v1289
        %v1360 = vunpack.c.l.b16 %v1290
        %v1361 = vunpack.c.h.b16 %v1290
        %v1362 = vunpack.c.l.b16 %v1291
        %v1363 = vunpack.c.h.b16 %v1291
        %v1364 = vunpack.c.l.b16 %v1292
        %v1365 = vunpack.c.h.b16 %v1292
        %v1366 = vunpack.c.l.b16 %v1293
        %v1367 = vunpack.c.h.b16 %v1293
        %v1368 = vunpack.c.l.b16 %v1294
        %v1369 = vunpack.c.h.b16 %v1294
        %v1370 = vunpack.c.l.b16 %v1295
        %v1371 = vunpack.c.h.b16 %v1295
        %v1372 = vunpack.c.l.b16 %v1296
        %v1373 = vunpack.c.h.b16 %v1296
        %v1374 = vunpack.c.l.b16 %v1297
        %v1375 = vunpack.c.h.b16 %v1297
        %v1376 = vunpack.c.l.b16 %v1298
        %v1377 = vunpack.c.h.b16 %v1298
        %v1378 = vunpack.c.l.b16 %v1299
        %v1379 = vunpack.c.h.b16 %v1299
        %v1380 = vunpack.c.l.b16 %v1300
        %v1381 = vunpack.c.h.b16 %v1300
        %v1382 = vunpack.c.l.b16 %v1301
        %v1383 = vunpack.c.h.b16 %v1301
        %v1384 = vunpack.c.l.b16 %v1302
        %v1385 = vunpack.c.h.b16 %v1302
        %v1386 = vunpack.c.l.b16 %v1303
        %v1387 = vunpack.c.h.b16 %v1303
        %v1388 = vunpack.c.l.b16 %v1304
        %v1389 = vunpack.c.h.b16 %v1304
        %v1390 = vunpack.c.l.b16 %v1305
        %v1391 = vunpack.c.h.b16 %v1305
        %v1392 = vunpack.c.l.b16 %v1306
        %v1393 = vunpack.c.h.b16 %v1306
        %v1394 = vunpack.c.l.b16 %v1307
        %v1395 = vunpack.c.h.b16 %v1307
        %v1396 = vunpack.c.l.b16 %v1308
        %v1397 = vunpack.c.h.b16 %v1308
        %v1398 = vunpack.c.l.b16 %v1309
        %v1399 = vunpack.c.h.b16 %v1309
        %v1400 = vunpack.c.l.b16 %v1310
        %v1401 = vunpack.c.h.b16 %v1310
        %v1402 = vunpack.c.l.b16 %v1311
        %v1403 = vunpack.c.h.b16 %v1311
        %v1404 = vunpack.c.l.b16 %v1312
        %v1405 = vunpack.c.h.b16 %v1312
        %v1406 = vunpack.c.l.b16 %v1313
        %v1407 = vunpack.c.h.b16 %v1313
        %v1408 = vunpack.c.l.b16 %v1314
        %v1409 = vunpack.c.h.b16 %v1314
        %v1410 = vunpack.c.l.b16 %v1315
        %v1411 = vunpack.c.h.b16 %v1315
        %v1412 = vpack.c.b16 %v1352, %v1348
        %v1413 = vpack.c.b16 %v1353, %v1349
        %v1414 = vpack.c.b16 %v1354, %v1350
        %v1415 = vpack.c.b16 %v1355, %v1351
        %v1416 = vpack.c.b16 %v1360, %v1356
        %v1417 = vpack.c.b16 %v1361, %v1357
        %v1418 = vpack.c.b16 %v1362, %v1358
        %v1419 = vpack.c.b16 %v1363, %v1359
        %v1420 = vpack.c.b16 %v1368, %v1364
        %v1421 = vpack.c.b16 %v1369, %v1365
        %v1422 = vpack.c.b16 %v1370, %v1366
        %v1423 = vpack.c.b16 %v1371, %v1367
        %v1424 = vpack.c.b16 %v1376, %v1372
        %v1425 = vpack.c.b16 %v1377, %v1373
        %v1426 = vpack.c.b16 %v1378, %v1374
        %v1427 = vpack.c.b16 %v1379, %v1375
        %v1428 = vpack.c.b16 %v1384, %v1380
        %v1429 = vpack.c.b16 %v1385, %v1381
        %v1430 = vpack.c.b16 %v1386, %v1382
        %v1431 = vpack.c.b16 %v1387, %v1383
        %v1432 = vpack.c.b16 %v1392, %v1388
        %v1433 = vpack.c.b16 %v1393, %v1389
        %v1434 = vpack.c.b16 %v1394, %v1390
        %v1435 = vpack.c.b16 %v1395, %v1391
        %v1436 = vpack.c.b16 %v1400, %v1396
        %v1437 = vpack.c.b16 %v1401, %v1397
        %v1438 = vpack.c.b16 %v1402, %v1398
        %v1439 = vpack.c.b16 %v1403, %v1399
        %v1440 = vpack.c.b16 %v1408, %v1404
        %v1441 = vpack.c.b16 %v1409, %v1405
        %v1442 = vpack.c.b16 %v1410, %v1406
        %v1443 = vpack.c.b16 %v1411, %v1407
        %1476 = vmatpush.bf16.msra.mxu0 %v1440
        %1477 = vmatpush.bf16.msra.mxu0 %v1436
        %1478 = vmatpush.bf16.msra.mxu0 %v1432
        %1479 = vmatpush.bf16.msra.mxu0 %v1428
        %1480 = vmatpush.bf16.msra.mxu0 %v1424
        %1481 = vmatpush.bf16.msra.mxu0 %v1420
        %1482 = vmatpush.bf16.msra.mxu0 %v1416
        %1483 = vmatpush.bf16.msra.mxu0 %v1412
        %1484 = vmatmul.bf16.gmra.mxu0 %v300
        %v1485 = vpop.f32.mrf.mxu0
        %v1486 = vadd.f32 0.0, %v1485
        %v1487 = vpop.f32.mrf.mxu0
        %v1488 = vadd.f32 0.0, %v1487
        %1489 = vmatmul.bf16.gmra.mxu0 %v301
        %v1490 = vpop.f32.mrf.mxu0
        %v1491 = vadd.f32 0.0, %v1490
        %v1492 = vpop.f32.mrf.mxu0
        %v1493 = vadd.f32 0.0, %v1492
        %1494 = vmatmul.bf16.gmra.mxu0 %v302
        %v1495 = vpop.f32.mrf.mxu0
        %v1496 = vadd.f32 0.0, %v1495
        %v1497 = vpop.f32.mrf.mxu0
        %v1498 = vadd.f32 0.0, %v1497
        %1499 = vmatmul.bf16.gmra.mxu0 %v303
        %v1500 = vpop.f32.mrf.mxu0
        %v1501 = vadd.f32 0.0, %v1500
        %v1502 = vpop.f32.mrf.mxu0
        %v1503 = vadd.f32 0.0, %v1502
        %1504 = vmatmul.bf16.gmra.mxu0 %v304
        %v1505 = vpop.f32.mrf.mxu0
        %v1506 = vadd.f32 0.0, %v1505
        %v1507 = vpop.f32.mrf.mxu0
        %v1508 = vadd.f32 0.0, %v1507
        %1509 = vmatmul.bf16.gmra.mxu0 %v305
        %v1510 = vpop.f32.mrf.mxu0
        %v1511 = vadd.f32 0.0, %v1510
        %v1512 = vpop.f32.mrf.mxu0
        %v1513 = vadd.f32 0.0, %v1512
        %1514 = vmatmul.bf16.gmra.mxu0 %v306
        %v1515 = vpop.f32.mrf.mxu0
        %v1516 = vadd.f32 0.0, %v1515
        %v1517 = vpop.f32.mrf.mxu0
        %v1518 = vadd.f32 0.0, %v1517
        %1519 = vdwg.mxu0
        %1520 = vmatpush.bf16.msra.mxu0 %v1441
        %1521 = vmatpush.bf16.msra.mxu0 %v1437
        %1522 = vmatpush.bf16.msra.mxu0 %v1433
        %1523 = vmatpush.bf16.msra.mxu0 %v1429
        %1524 = vmatpush.bf16.msra.mxu0 %v1425
        %1525 = vmatpush.bf16.msra.mxu0 %v1421
        %1526 = vmatpush.bf16.msra.mxu0 %v1417
        %1527 = vmatpush.bf16.msra.mxu0 %v1413
        %1528 = vmatmul.bf16.gmra.mxu0 %v300
        %v1529 = vpop.f32.mrf.mxu0
        %v1530 = vadd.f32 0.0, %v1529
        %v1531 = vpop.f32.mrf.mxu0
        %v1532 = vadd.f32 0.0, %v1531
        %1533 = vmatmul.bf16.gmra.mxu0 %v301
        %v1534 = vpop.f32.mrf.mxu0
        %v1535 = vadd.f32 0.0, %v1534
        %v1536 = vpop.f32.mrf.mxu0
        %v1537 = vadd.f32 0.0, %v1536
        %1538 = vmatmul.bf16.gmra.mxu0 %v302
        %v1539 = vpop.f32.mrf.mxu0
        %v1540 = vadd.f32 0.0, %v1539
        %v1541 = vpop.f32.mrf.mxu0
        %v1542 = vadd.f32 0.0, %v1541
        %1543 = vmatmul.bf16.gmra.mxu0 %v303
        %v1544 = vpop.f32.mrf.mxu0
        %v1545 = vadd.f32 0.0, %v1544
        %v1546 = vpop.f32.mrf.mxu0
        %v1547 = vadd.f32 0.0, %v1546
        %1548 = vmatmul.bf16.gmra.mxu0 %v304
        %v1549 = vpop.f32.mrf.mxu0
        %v1550 = vadd.f32 0.0, %v1549
        %v1551 = vpop.f32.mrf.mxu0
        %v1552 = vadd.f32 0.0, %v1551
        %1553 = vmatmul.bf16.gmra.mxu0 %v305
        %v1554 = vpop.f32.mrf.mxu0
        %v1555 = vadd.f32 0.0, %v1554
        %v1556 = vpop.f32.mrf.mxu0
        %v1557 = vadd.f32 0.0, %v1556
        %1558 = vmatmul.bf16.gmra.mxu0 %v306
        %v1559 = vpop.f32.mrf.mxu0
        %v1560 = vadd.f32 0.0, %v1559
        %v1561 = vpop.f32.mrf.mxu0
        %v1562 = vadd.f32 0.0, %v1561
        %1563 = vdwg.mxu0
        %1564 = vmatpush.bf16.msra.mxu0 %v1442
        %1565 = vmatpush.bf16.msra.mxu0 %v1438
        %1566 = vmatpush.bf16.msra.mxu0 %v1434
        %1567 = vmatpush.bf16.msra.mxu0 %v1430
        %1568 = vmatpush.bf16.msra.mxu0 %v1426
        %1569 = vmatpush.bf16.msra.mxu0 %v1422
        %1570 = vmatpush.bf16.msra.mxu0 %v1418
        %1571 = vmatpush.bf16.msra.mxu0 %v1414
        %1572 = vmatmul.bf16.gmra.mxu0 %v300
        %v1573 = vpop.f32.mrf.mxu0
        %v1574 = vadd.f32 0.0, %v1573
        %v1575 = vpop.f32.mrf.mxu0
        %v1576 = vadd.f32 0.0, %v1575
        %1577 = vmatmul.bf16.gmra.mxu0 %v301
        %v1578 = vpop.f32.mrf.mxu0
        %v1579 = vadd.f32 0.0, %v1578
        %v1580 = vpop.f32.mrf.mxu0
        %v1581 = vadd.f32 0.0, %v1580
        %1582 = vmatmul.bf16.gmra.mxu0 %v302
        %v1583 = vpop.f32.mrf.mxu0
        %v1584 = vadd.f32 0.0, %v1583
        %v1585 = vpop.f32.mrf.mxu0
        %v1586 = vadd.f32 0.0, %v1585
        %1587 = vmatmul.bf16.gmra.mxu0 %v303
        %v1588 = vpop.f32.mrf.mxu0
        %v1589 = vadd.f32 0.0, %v1588
        %v1590 = vpop.f32.mrf.mxu0
        %v1591 = vadd.f32 0.0, %v1590
        %1592 = vmatmul.bf16.gmra.mxu0 %v304
        %v1593 = vpop.f32.mrf.mxu0
        %v1594 = vadd.f32 0.0, %v1593
        %v1595 = vpop.f32.mrf.mxu0
        %v1596 = vadd.f32 0.0, %v1595
        %1597 = vmatmul.bf16.gmra.mxu0 %v305
        %v1598 = vpop.f32.mrf.mxu0
        %v1599 = vadd.f32 0.0, %v1598
        %v1600 = vpop.f32.mrf.mxu0
        %v1601 = vadd.f32 0.0, %v1600
        %1602 = vmatmul.bf16.gmra.mxu0 %v306
        %v1603 = vpop.f32.mrf.mxu0
        %v1604 = vadd.f32 0.0, %v1603
        %v1605 = vpop.f32.mrf.mxu0
        %v1606 = vadd.f32 0.0, %v1605
        %1607 = vdwg.mxu0
        %1608 = vmatpush.bf16.msra.mxu0 %v1443
        %1609 = vmatpush.bf16.msra.mxu0 %v1439
        %1610 = vmatpush.bf16.msra.mxu0 %v1435
        %1611 = vmatpush.bf16.msra.mxu0 %v1431
        %1612 = vmatpush.bf16.msra.mxu0 %v1427
        %1613 = vmatpush.bf16.msra.mxu0 %v1423
        %1614 = vmatpush.bf16.msra.mxu0 %v1419
        %1615 = vmatpush.bf16.msra.mxu0 %v1415
        %1616 = vmatmul.bf16.gmra.mxu0 %v300
        %v1617 = vpop.f32.mrf.mxu0
        %v1618 = vadd.f32 0.0, %v1617
        %v1619 = vpop.f32.mrf.mxu0
        %v1620 = vadd.f32 0.0, %v1619
        %1621 = vmatmul.bf16.gmra.mxu0 %v301
        %v1622 = vpop.f32.mrf.mxu0
        %v1623 = vadd.f32 0.0, %v1622
        %v1624 = vpop.f32.mrf.mxu0
        %v1625 = vadd.f32 0.0, %v1624
        %1626 = vmatmul.bf16.gmra.mxu0 %v302
        %v1627 = vpop.f32.mrf.mxu0
        %v1628 = vadd.f32 0.0, %v1627
        %v1629 = vpop.f32.mrf.mxu0
        %v1630 = vadd.f32 0.0, %v1629
        %1631 = vmatmul.bf16.gmra.mxu0 %v303
        %v1632 = vpop.f32.mrf.mxu0
        %v1633 = vadd.f32 0.0, %v1632
        %v1634 = vpop.f32.mrf.mxu0
        %v1635 = vadd.f32 0.0, %v1634
        %1636 = vmatmul.bf16.gmra.mxu0 %v304
        %v1637 = vpop.f32.mrf.mxu0
        %v1638 = vadd.f32 0.0, %v1637
        %v1639 = vpop.f32.mrf.mxu0
        %v1640 = vadd.f32 0.0, %v1639
        %1641 = vmatmul.bf16.gmra.mxu0 %v305
        %v1642 = vpop.f32.mrf.mxu0
        %v1643 = vadd.f32 0.0, %v1642
        %v1644 = vpop.f32.mrf.mxu0
        %v1645 = vadd.f32 0.0, %v1644
        %1646 = vmatmul.bf16.gmra.mxu0 %v306
        %v1647 = vpop.f32.mrf.mxu0
        %v1648 = vadd.f32 0.0, %v1647
        %v1649 = vpop.f32.mrf.mxu0
        %v1650 = vadd.f32 0.0, %v1649
        %1651 = vdwg.mxu0
        %v1652 = vxor.u32 %v1486, 2147483648
        %v1653 = vxor.u32 %v1530, 2147483648
        %v1654 = vxor.u32 %v1488, 2147483648
        %v1655 = vxor.u32 %v1532, 2147483648
        %v1656 = vxor.u32 %v1491, 2147483648
        %v1657 = vxor.u32 %v1535, 2147483648
        %v1658 = vxor.u32 %v1493, 2147483648
        %v1659 = vxor.u32 %v1537, 2147483648
        %v1660 = vxor.u32 %v1496, 2147483648
        %v1661 = vxor.u32 %v1540, 2147483648
        %v1662 = vxor.u32 %v1498, 2147483648
        %v1663 = vxor.u32 %v1542, 2147483648
        %v1664 = vxor.u32 %v1501, 2147483648
        %v1665 = vxor.u32 %v1545, 2147483648
        %v1666 = vxor.u32 %v1503, 2147483648
        %v1667 = vxor.u32 %v1547, 2147483648
        %v1668 = vxor.u32 %v1506, 2147483648
        %v1669 = vxor.u32 %v1550, 2147483648
        %v1670 = vxor.u32 %v1508, 2147483648
        %v1671 = vxor.u32 %v1552, 2147483648
        %v1672 = vxor.u32 %v1511, 2147483648
        %v1673 = vxor.u32 %v1555, 2147483648
        %v1674 = vxor.u32 %v1513, 2147483648
        %v1675 = vxor.u32 %v1557, 2147483648
        %v1676 = vxor.u32 %v1516, 2147483648
        %v1677 = vxor.u32 %v1560, 2147483648
        %v1678 = vxor.u32 %v1518, 2147483648
        %v1679 = vxor.u32 %v1562, 2147483648
        %v1680 = vmul.f32 %v1652, 1.442695
        %v1681 = vpow.pop %v1680
        %v1682 = vmul.f32 %v1653, 1.442695
        %v1683 = vpow.pop %v1682
        %v1684 = vmul.f32 %v1654, 1.442695
        %v1685 = vpow.pop %v1684
        %v1686 = vmul.f32 %v1655, 1.442695
        %v1687 = vpow.pop %v1686
        %v1688 = vmul.f32 %v1656, 1.442695
        %v1689 = vpow.pop %v1688
        %v1690 = vmul.f32 %v1657, 1.442695
        %v1691 = vpow.pop %v1690
        %v1692 = vmul.f32 %v1658, 1.442695
        %v1693 = vpow.pop %v1692
        %v1694 = vmul.f32 %v1659, 1.442695
        %v1695 = vpow.pop %v1694
        %v1696 = vmul.f32 %v1660, 1.442695
        %v1697 = vpow.pop %v1696
        %v1698 = vmul.f32 %v1661, 1.442695
        %v1699 = vpow.pop %v1698
        %v1700 = vmul.f32 %v1662, 1.442695
        %v1701 = vpow.pop %v1700
        %v1702 = vmul.f32 %v1663, 1.442695
        %v1703 = vpow.pop %v1702
        %v1704 = vmul.f32 %v1664, 1.442695
        %v1705 = vpow.pop %v1704
        %v1706 = vmul.f32 %v1665, 1.442695
        %v1707 = vpow.pop %v1706
        %v1708 = vmul.f32 %v1666, 1.442695
        %v1709 = vpow.pop %v1708
        %v1710 = vmul.f32 %v1667, 1.442695
        %v1711 = vpow.pop %v1710
        %v1712 = vmul.f32 %v1668, 1.442695
        %v1713 = vpow.pop %v1712
        %v1714 = vmul.f32 %v1669, 1.442695
        %v1715 = vpow.pop %v1714
        %v1716 = vmul.f32 %v1670, 1.442695
        %v1717 = vpow.pop %v1716
        %v1718 = vmul.f32 %v1671, 1.442695
        %v1719 = vpow.pop %v1718
        %v1720 = vmul.f32 %v1672, 1.442695
        %v1721 = vpow.pop %v1720
        %v1722 = vmul.f32 %v1673, 1.442695
        %v1723 = vpow.pop %v1722
        %v1724 = vmul.f32 %v1674, 1.442695
        %v1725 = vpow.pop %v1724
        %v1726 = vmul.f32 %v1675, 1.442695
        %v1727 = vpow.pop %v1726
        %v1728 = vmul.f32 %v1676, 1.442695
        %v1729 = vpow.pop %v1728
        %v1730 = vmul.f32 %v1677, 1.442695
        %v1731 = vpow.pop %v1730
        %v1732 = vmul.f32 %v1678, 1.442695
        %v1733 = vpow.pop %v1732
        %v1734 = vmul.f32 %v1679, 1.442695
        %v1735 = vpow.pop %v1734
        %v1736 = vadd.f32 %v1681, 1.0
        %v1737 = vadd.f32 %v1683, 1.0
        %v1738 = vadd.f32 %v1685, 1.0
        %v1739 = vadd.f32 %v1687, 1.0
        %v1740 = vadd.f32 %v1689, 1.0
        %v1741 = vadd.f32 %v1691, 1.0
        %v1742 = vadd.f32 %v1693, 1.0
        %v1743 = vadd.f32 %v1695, 1.0
        %v1744 = vadd.f32 %v1697, 1.0
        %v1745 = vadd.f32 %v1699, 1.0
        %v1746 = vadd.f32 %v1701, 1.0
        %v1747 = vadd.f32 %v1703, 1.0
        %v1748 = vadd.f32 %v1705, 1.0
        %v1749 = vadd.f32 %v1707, 1.0
        %v1750 = vadd.f32 %v1709, 1.0
        %v1751 = vadd.f32 %v1711, 1.0
        %v1752 = vadd.f32 %v1713, 1.0
        %v1753 = vadd.f32 %v1715, 1.0
        %v1754 = vadd.f32 %v1717, 1.0
        %v1755 = vadd.f32 %v1719, 1.0
        %v1756 = vadd.f32 %v1721, 1.0
        %v1757 = vadd.f32 %v1723, 1.0
        %v1758 = vadd.f32 %v1725, 1.0
        %v1759 = vadd.f32 %v1727, 1.0
        %v1760 = vadd.f32 %v1729, 1.0
        %v1761 = vadd.f32 %v1731, 1.0
        %v1762 = vadd.f32 %v1733, 1.0
        %v1763 = vadd.f32 %v1735, 1.0
        %v1764 = vrcp.pop %v1736
        %v1765 = vmul.f32 %v1736, %v1764
        %v1766 = vsub.f32 1.0, %v1765
        %v1767 = vmul.f32 %v1764, %v1766
        %v1768 = vadd.f32 %v1764, %v1767
        %vm1769 = vweird.f32 %v1736
        %vm1770 = vweird.f32 %v1764
        %vm1771 = vmor %vm1769, %vm1770
        %v1772 = vsel %vm1771, %v1764, %v1768
        %v1773 = vand.u32 2147483647, %v1736
        %vm1774 = vcmp.eq.f32.partialorder %v1773, 8.507059e+37
        %v1775 = vand.u32 %v1736, 2147483648
        %v1776 = vor.u32 1.1754944e-38, %v1775
        %v1777 = vsel %vm1774, %v1776, %v1772
        %v1778 = vmul.f32 1.0, %v1777
        %v1779 = vrcp.pop %v1737
        %v1780 = vmul.f32 %v1737, %v1779
        %v1781 = vsub.f32 1.0, %v1780
        %v1782 = vmul.f32 %v1779, %v1781
        %v1783 = vadd.f32 %v1779, %v1782
        %vm1784 = vweird.f32 %v1737
        %vm1785 = vweird.f32 %v1779
        %vm1786 = vmor %vm1784, %vm1785
        %v1787 = vsel %vm1786, %v1779, %v1783
        %v1788 = vand.u32 2147483647, %v1737
        %vm1789 = vcmp.eq.f32.partialorder %v1788, 8.507059e+37
        %v1790 = vand.u32 %v1737, 2147483648
        %v1791 = vor.u32 1.1754944e-38, %v1790
        %v1792 = vsel %vm1789, %v1791, %v1787
        %v1793 = vmul.f32 1.0, %v1792
        %v1794 = vrcp.pop %v1738
        %v1795 = vmul.f32 %v1738, %v1794
        %v1796 = vsub.f32 1.0, %v1795
        %v1797 = vmul.f32 %v1794, %v1796
        %v1798 = vadd.f32 %v1794, %v1797
        %vm1799 = vweird.f32 %v1738
        %vm1800 = vweird.f32 %v1794
        %vm1801 = vmor %vm1799, %vm1800
        %v1802 = vsel %vm1801, %v1794, %v1798
        %v1803 = vand.u32 2147483647, %v1738
        %vm1804 = vcmp.eq.f32.partialorder %v1803, 8.507059e+37
        %v1805 = vand.u32 %v1738, 2147483648
        %v1806 = vor.u32 1.1754944e-38, %v1805
        %v1807 = vsel %vm1804, %v1806, %v1802
        %v1808 = vmul.f32 1.0, %v1807
        %v1809 = vrcp.pop %v1739
        %v1810 = vmul.f32 %v1739, %v1809
        %v1811 = vsub.f32 1.0, %v1810
        %v1812 = vmul.f32 %v1809, %v1811
        %v1813 = vadd.f32 %v1809, %v1812
        %vm1814 = vweird.f32 %v1739
        %vm1815 = vweird.f32 %v1809
        %vm1816 = vmor %vm1814, %vm1815
        %v1817 = vsel %vm1816, %v1809, %v1813
        %v1818 = vand.u32 2147483647, %v1739
        %vm1819 = vcmp.eq.f32.partialorder %v1818, 8.507059e+37
        %v1820 = vand.u32 %v1739, 2147483648
        %v1821 = vor.u32 1.1754944e-38, %v1820
        %v1822 = vsel %vm1819, %v1821, %v1817
        %v1823 = vmul.f32 1.0, %v1822
        %v1824 = vrcp.pop %v1740
        %v1825 = vmul.f32 %v1740, %v1824
        %v1826 = vsub.f32 1.0, %v1825
        %v1827 = vmul.f32 %v1824, %v1826
        %v1828 = vadd.f32 %v1824, %v1827
        %vm1829 = vweird.f32 %v1740
        %vm1830 = vweird.f32 %v1824
        %vm1831 = vmor %vm1829, %vm1830
        %v1832 = vsel %vm1831, %v1824, %v1828
        %v1833 = vand.u32 2147483647, %v1740
        %vm1834 = vcmp.eq.f32.partialorder %v1833, 8.507059e+37
        %v1835 = vand.u32 %v1740, 2147483648
        %v1836 = vor.u32 1.1754944e-38, %v1835
        %v1837 = vsel %vm1834, %v1836, %v1832
        %v1838 = vmul.f32 1.0, %v1837
        %v1839 = vrcp.pop %v1741
        %v1840 = vmul.f32 %v1741, %v1839
        %v1841 = vsub.f32 1.0, %v1840
        %v1842 = vmul.f32 %v1839, %v1841
        %v1843 = vadd.f32 %v1839, %v1842
        %vm1844 = vweird.f32 %v1741
        %vm1845 = vweird.f32 %v1839
        %vm1846 = vmor %vm1844, %vm1845
        %v1847 = vsel %vm1846, %v1839, %v1843
        %v1848 = vand.u32 2147483647, %v1741
        %vm1849 = vcmp.eq.f32.partialorder %v1848, 8.507059e+37
        %v1850 = vand.u32 %v1741, 2147483648
        %v1851 = vor.u32 1.1754944e-38, %v1850
        %v1852 = vsel %vm1849, %v1851, %v1847
        %v1853 = vmul.f32 1.0, %v1852
        %v1854 = vrcp.pop %v1742
        %v1855 = vmul.f32 %v1742, %v1854
        %v1856 = vsub.f32 1.0, %v1855
        %v1857 = vmul.f32 %v1854, %v1856
        %v1858 = vadd.f32 %v1854, %v1857
        %vm1859 = vweird.f32 %v1742
        %vm1860 = vweird.f32 %v1854
        %vm1861 = vmor %vm1859, %vm1860
        %v1862 = vsel %vm1861, %v1854, %v1858
        %v1863 = vand.u32 2147483647, %v1742
        %vm1864 = vcmp.eq.f32.partialorder %v1863, 8.507059e+37
        %v1865 = vand.u32 %v1742, 2147483648
        %v1866 = vor.u32 1.1754944e-38, %v1865
        %v1867 = vsel %vm1864, %v1866, %v1862
        %v1868 = vmul.f32 1.0, %v1867
        %v1869 = vrcp.pop %v1743
        %v1870 = vmul.f32 %v1743, %v1869
        %v1871 = vsub.f32 1.0, %v1870
        %v1872 = vmul.f32 %v1869, %v1871
        %v1873 = vadd.f32 %v1869, %v1872
        %vm1874 = vweird.f32 %v1743
        %vm1875 = vweird.f32 %v1869
        %vm1876 = vmor %vm1874, %vm1875
        %v1877 = vsel %vm1876, %v1869, %v1873
        %v1878 = vand.u32 2147483647, %v1743
        %vm1879 = vcmp.eq.f32.partialorder %v1878, 8.507059e+37
        %v1880 = vand.u32 %v1743, 2147483648
        %v1881 = vor.u32 1.1754944e-38, %v1880
        %v1882 = vsel %vm1879, %v1881, %v1877
        %v1883 = vmul.f32 1.0, %v1882
        %v1884 = vrcp.pop %v1744
        %v1885 = vmul.f32 %v1744, %v1884
        %v1886 = vsub.f32 1.0, %v1885
        %v1887 = vmul.f32 %v1884, %v1886
        %v1888 = vadd.f32 %v1884, %v1887
        %vm1889 = vweird.f32 %v1744
        %vm1890 = vweird.f32 %v1884
        %vm1891 = vmor %vm1889, %vm1890
        %v1892 = vsel %vm1891, %v1884, %v1888
        %v1893 = vand.u32 2147483647, %v1744
        %vm1894 = vcmp.eq.f32.partialorder %v1893, 8.507059e+37
        %v1895 = vand.u32 %v1744, 2147483648
        %v1896 = vor.u32 1.1754944e-38, %v1895
        %v1897 = vsel %vm1894, %v1896, %v1892
        %v1898 = vmul.f32 1.0, %v1897
        %v1899 = vrcp.pop %v1745
        %v1900 = vmul.f32 %v1745, %v1899
        %v1901 = vsub.f32 1.0, %v1900
        %v1902 = vmul.f32 %v1899, %v1901
        %v1903 = vadd.f32 %v1899, %v1902
        %vm1904 = vweird.f32 %v1745
        %vm1905 = vweird.f32 %v1899
        %vm1906 = vmor %vm1904, %vm1905
        %v1907 = vsel %vm1906, %v1899, %v1903
        %v1908 = vand.u32 2147483647, %v1745
        %vm1909 = vcmp.eq.f32.partialorder %v1908, 8.507059e+37
        %v1910 = vand.u32 %v1745, 2147483648
        %v1911 = vor.u32 1.1754944e-38, %v1910
        %v1912 = vsel %vm1909, %v1911, %v1907
        %v1913 = vmul.f32 1.0, %v1912
        %v1914 = vrcp.pop %v1746
        %v1915 = vmul.f32 %v1746, %v1914
        %v1916 = vsub.f32 1.0, %v1915
        %v1917 = vmul.f32 %v1914, %v1916
        %v1918 = vadd.f32 %v1914, %v1917
        %vm1919 = vweird.f32 %v1746
        %vm1920 = vweird.f32 %v1914
        %vm1921 = vmor %vm1919, %vm1920
        %v1922 = vsel %vm1921, %v1914, %v1918
        %v1923 = vand.u32 2147483647, %v1746
        %vm1924 = vcmp.eq.f32.partialorder %v1923, 8.507059e+37
        %v1925 = vand.u32 %v1746, 2147483648
        %v1926 = vor.u32 1.1754944e-38, %v1925
        %v1927 = vsel %vm1924, %v1926, %v1922
        %v1928 = vmul.f32 1.0, %v1927
        %v1929 = vrcp.pop %v1747
        %v1930 = vmul.f32 %v1747, %v1929
        %v1931 = vsub.f32 1.0, %v1930
        %v1932 = vmul.f32 %v1929, %v1931
        %v1933 = vadd.f32 %v1929, %v1932
        %vm1934 = vweird.f32 %v1747
        %vm1935 = vweird.f32 %v1929
        %vm1936 = vmor %vm1934, %vm1935
        %v1937 = vsel %vm1936, %v1929, %v1933
        %v1938 = vand.u32 2147483647, %v1747
        %vm1939 = vcmp.eq.f32.partialorder %v1938, 8.507059e+37
        %v1940 = vand.u32 %v1747, 2147483648
        %v1941 = vor.u32 1.1754944e-38, %v1940
        %v1942 = vsel %vm1939, %v1941, %v1937
        %v1943 = vmul.f32 1.0, %v1942
        %v1944 = vrcp.pop %v1748
        %v1945 = vmul.f32 %v1748, %v1944
        %v1946 = vsub.f32 1.0, %v1945
        %v1947 = vmul.f32 %v1944, %v1946
        %v1948 = vadd.f32 %v1944, %v1947
        %vm1949 = vweird.f32 %v1748
        %vm1950 = vweird.f32 %v1944
        %vm1951 = vmor %vm1949, %vm1950
        %v1952 = vsel %vm1951, %v1944, %v1948
        %v1953 = vand.u32 2147483647, %v1748
        %vm1954 = vcmp.eq.f32.partialorder %v1953, 8.507059e+37
        %v1955 = vand.u32 %v1748, 2147483648
        %v1956 = vor.u32 1.1754944e-38, %v1955
        %v1957 = vsel %vm1954, %v1956, %v1952
        %v1958 = vmul.f32 1.0, %v1957
        %v1959 = vrcp.pop %v1749
        %v1960 = vmul.f32 %v1749, %v1959
        %v1961 = vsub.f32 1.0, %v1960
        %v1962 = vmul.f32 %v1959, %v1961
        %v1963 = vadd.f32 %v1959, %v1962
        %vm1964 = vweird.f32 %v1749
        %vm1965 = vweird.f32 %v1959
        %vm1966 = vmor %vm1964, %vm1965
        %v1967 = vsel %vm1966, %v1959, %v1963
        %v1968 = vand.u32 2147483647, %v1749
        %vm1969 = vcmp.eq.f32.partialorder %v1968, 8.507059e+37
        %v1970 = vand.u32 %v1749, 2147483648
        %v1971 = vor.u32 1.1754944e-38, %v1970
        %v1972 = vsel %vm1969, %v1971, %v1967
        %v1973 = vmul.f32 1.0, %v1972
        %v1974 = vrcp.pop %v1750
        %v1975 = vmul.f32 %v1750, %v1974
        %v1976 = vsub.f32 1.0, %v1975
        %v1977 = vmul.f32 %v1974, %v1976
        %v1978 = vadd.f32 %v1974, %v1977
        %vm1979 = vweird.f32 %v1750
        %vm1980 = vweird.f32 %v1974
        %vm1981 = vmor %vm1979, %vm1980
        %v1982 = vsel %vm1981, %v1974, %v1978
        %v1983 = vand.u32 2147483647, %v1750
        %vm1984 = vcmp.eq.f32.partialorder %v1983, 8.507059e+37
        %v1985 = vand.u32 %v1750, 2147483648
        %v1986 = vor.u32 1.1754944e-38, %v1985
        %v1987 = vsel %vm1984, %v1986, %v1982
        %v1988 = vmul.f32 1.0, %v1987
        %v1989 = vrcp.pop %v1751
        %v1990 = vmul.f32 %v1751, %v1989
        %v1991 = vsub.f32 1.0, %v1990
        %v1992 = vmul.f32 %v1989, %v1991
        %v1993 = vadd.f32 %v1989, %v1992
        %vm1994 = vweird.f32 %v1751
        %vm1995 = vweird.f32 %v1989
        %vm1996 = vmor %vm1994, %vm1995
        %v1997 = vsel %vm1996, %v1989, %v1993
        %v1998 = vand.u32 2147483647, %v1751
        %vm1999 = vcmp.eq.f32.partialorder %v1998, 8.507059e+37
        %v2000 = vand.u32 %v1751, 2147483648
        %v2001 = vor.u32 1.1754944e-38, %v2000
        %v2002 = vsel %vm1999, %v2001, %v1997
        %v2003 = vmul.f32 1.0, %v2002
        %v2004 = vrcp.pop %v1752
        %v2005 = vmul.f32 %v1752, %v2004
        %v2006 = vsub.f32 1.0, %v2005
        %v2007 = vmul.f32 %v2004, %v2006
        %v2008 = vadd.f32 %v2004, %v2007
        %vm2009 = vweird.f32 %v1752
        %vm2010 = vweird.f32 %v2004
        %vm2011 = vmor %vm2009, %vm2010
        %v2012 = vsel %vm2011, %v2004, %v2008
        %v2013 = vand.u32 2147483647, %v1752
        %vm2014 = vcmp.eq.f32.partialorder %v2013, 8.507059e+37
        %v2015 = vand.u32 %v1752, 2147483648
        %v2016 = vor.u32 1.1754944e-38, %v2015
        %v2017 = vsel %vm2014, %v2016, %v2012
        %v2018 = vmul.f32 1.0, %v2017
        %v2019 = vrcp.pop %v1753
        %v2020 = vmul.f32 %v1753, %v2019
        %v2021 = vsub.f32 1.0, %v2020
        %v2022 = vmul.f32 %v2019, %v2021
        %v2023 = vadd.f32 %v2019, %v2022
        %vm2024 = vweird.f32 %v1753
        %vm2025 = vweird.f32 %v2019
        %vm2026 = vmor %vm2024, %vm2025
        %v2027 = vsel %vm2026, %v2019, %v2023
        %v2028 = vand.u32 2147483647, %v1753
        %vm2029 = vcmp.eq.f32.partialorder %v2028, 8.507059e+37
        %v2030 = vand.u32 %v1753, 2147483648
        %v2031 = vor.u32 1.1754944e-38, %v2030
        %v2032 = vsel %vm2029, %v2031, %v2027
        %v2033 = vmul.f32 1.0, %v2032
        %v2034 = vrcp.pop %v1754
        %v2035 = vmul.f32 %v1754, %v2034
        %v2036 = vsub.f32 1.0, %v2035
        %v2037 = vmul.f32 %v2034, %v2036
        %v2038 = vadd.f32 %v2034, %v2037
        %vm2039 = vweird.f32 %v1754
        %vm2040 = vweird.f32 %v2034
        %vm2041 = vmor %vm2039, %vm2040
        %v2042 = vsel %vm2041, %v2034, %v2038
        %v2043 = vand.u32 2147483647, %v1754
        %vm2044 = vcmp.eq.f32.partialorder %v2043, 8.507059e+37
        %v2045 = vand.u32 %v1754, 2147483648
        %v2046 = vor.u32 1.1754944e-38, %v2045
        %v2047 = vsel %vm2044, %v2046, %v2042
        %v2048 = vmul.f32 1.0, %v2047
        %v2049 = vrcp.pop %v1755
        %v2050 = vmul.f32 %v1755, %v2049
        %v2051 = vsub.f32 1.0, %v2050
        %v2052 = vmul.f32 %v2049, %v2051
        %v2053 = vadd.f32 %v2049, %v2052
        %vm2054 = vweird.f32 %v1755
        %vm2055 = vweird.f32 %v2049
        %vm2056 = vmor %vm2054, %vm2055
        %v2057 = vsel %vm2056, %v2049, %v2053
        %v2058 = vand.u32 2147483647, %v1755
        %vm2059 = vcmp.eq.f32.partialorder %v2058, 8.507059e+37
        %v2060 = vand.u32 %v1755, 2147483648
        %v2061 = vor.u32 1.1754944e-38, %v2060
        %v2062 = vsel %vm2059, %v2061, %v2057
        %v2063 = vmul.f32 1.0, %v2062
        %v2064 = vrcp.pop %v1756
        %v2065 = vmul.f32 %v1756, %v2064
        %v2066 = vsub.f32 1.0, %v2065
        %v2067 = vmul.f32 %v2064, %v2066
        %v2068 = vadd.f32 %v2064, %v2067
        %vm2069 = vweird.f32 %v1756
        %vm2070 = vweird.f32 %v2064
        %vm2071 = vmor %vm2069, %vm2070
        %v2072 = vsel %vm2071, %v2064, %v2068
        %v2073 = vand.u32 2147483647, %v1756
        %vm2074 = vcmp.eq.f32.partialorder %v2073, 8.507059e+37
        %v2075 = vand.u32 %v1756, 2147483648
        %v2076 = vor.u32 1.1754944e-38, %v2075
        %v2077 = vsel %vm2074, %v2076, %v2072
        %v2078 = vmul.f32 1.0, %v2077
        %v2079 = vrcp.pop %v1757
        %v2080 = vmul.f32 %v1757, %v2079
        %v2081 = vsub.f32 1.0, %v2080
        %v2082 = vmul.f32 %v2079, %v2081
        %v2083 = vadd.f32 %v2079, %v2082
        %vm2084 = vweird.f32 %v1757
        %vm2085 = vweird.f32 %v2079
        %vm2086 = vmor %vm2084, %vm2085
        %v2087 = vsel %vm2086, %v2079, %v2083
        %v2088 = vand.u32 2147483647, %v1757
        %vm2089 = vcmp.eq.f32.partialorder %v2088, 8.507059e+37
        %v2090 = vand.u32 %v1757, 2147483648
        %v2091 = vor.u32 1.1754944e-38, %v2090
        %v2092 = vsel %vm2089, %v2091, %v2087
        %v2093 = vmul.f32 1.0, %v2092
        %v2094 = vrcp.pop %v1758
        %v2095 = vmul.f32 %v1758, %v2094
        %v2096 = vsub.f32 1.0, %v2095
        %v2097 = vmul.f32 %v2094, %v2096
        %v2098 = vadd.f32 %v2094, %v2097
        %vm2099 = vweird.f32 %v1758
        %vm2100 = vweird.f32 %v2094
        %vm2101 = vmor %vm2099, %vm2100
        %v2102 = vsel %vm2101, %v2094, %v2098
        %v2103 = vand.u32 2147483647, %v1758
        %vm2104 = vcmp.eq.f32.partialorder %v2103, 8.507059e+37
        %v2105 = vand.u32 %v1758, 2147483648
        %v2106 = vor.u32 1.1754944e-38, %v2105
        %v2107 = vsel %vm2104, %v2106, %v2102
        %v2108 = vmul.f32 1.0, %v2107
        %v2109 = vrcp.pop %v1759
        %v2110 = vmul.f32 %v1759, %v2109
        %v2111 = vsub.f32 1.0, %v2110
        %v2112 = vmul.f32 %v2109, %v2111
        %v2113 = vadd.f32 %v2109, %v2112
        %vm2114 = vweird.f32 %v1759
        %vm2115 = vweird.f32 %v2109
        %vm2116 = vmor %vm2114, %vm2115
        %v2117 = vsel %vm2116, %v2109, %v2113
        %v2118 = vand.u32 2147483647, %v1759
        %vm2119 = vcmp.eq.f32.partialorder %v2118, 8.507059e+37
        %v2120 = vand.u32 %v1759, 2147483648
        %v2121 = vor.u32 1.1754944e-38, %v2120
        %v2122 = vsel %vm2119, %v2121, %v2117
        %v2123 = vmul.f32 1.0, %v2122
        %v2124 = vrcp.pop %v1760
        %v2125 = vmul.f32 %v1760, %v2124
        %v2126 = vsub.f32 1.0, %v2125
        %v2127 = vmul.f32 %v2124, %v2126
        %v2128 = vadd.f32 %v2124, %v2127
        %vm2129 = vweird.f32 %v1760
        %vm2130 = vweird.f32 %v2124
        %vm2131 = vmor %vm2129, %vm2130
        %v2132 = vsel %vm2131, %v2124, %v2128
        %v2133 = vand.u32 2147483647, %v1760
        %vm2134 = vcmp.eq.f32.partialorder %v2133, 8.507059e+37
        %v2135 = vand.u32 %v1760, 2147483648
        %v2136 = vor.u32 1.1754944e-38, %v2135
        %v2137 = vsel %vm2134, %v2136, %v2132
        %v2138 = vmul.f32 1.0, %v2137
        %v2139 = vrcp.pop %v1761
        %v2140 = vmul.f32 %v1761, %v2139
        %v2141 = vsub.f32 1.0, %v2140
        %v2142 = vmul.f32 %v2139, %v2141
        %v2143 = vadd.f32 %v2139, %v2142
        %vm2144 = vweird.f32 %v1761
        %vm2145 = vweird.f32 %v2139
        %vm2146 = vmor %vm2144, %vm2145
        %v2147 = vsel %vm2146, %v2139, %v2143
        %v2148 = vand.u32 2147483647, %v1761
        %vm2149 = vcmp.eq.f32.partialorder %v2148, 8.507059e+37
        %v2150 = vand.u32 %v1761, 2147483648
        %v2151 = vor.u32 1.1754944e-38, %v2150
        %v2152 = vsel %vm2149, %v2151, %v2147
        %v2153 = vmul.f32 1.0, %v2152
        %v2154 = vrcp.pop %v1762
        %v2155 = vmul.f32 %v1762, %v2154
        %v2156 = vsub.f32 1.0, %v2155
        %v2157 = vmul.f32 %v2154, %v2156
        %v2158 = vadd.f32 %v2154, %v2157
        %vm2159 = vweird.f32 %v1762
        %vm2160 = vweird.f32 %v2154
        %vm2161 = vmor %vm2159, %vm2160
        %v2162 = vsel %vm2161, %v2154, %v2158
        %v2163 = vand.u32 2147483647, %v1762
        %vm2164 = vcmp.eq.f32.partialorder %v2163, 8.507059e+37
        %v2165 = vand.u32 %v1762, 2147483648
        %v2166 = vor.u32 1.1754944e-38, %v2165
        %v2167 = vsel %vm2164, %v2166, %v2162
        %v2168 = vmul.f32 1.0, %v2167
        %v2169 = vrcp.pop %v1763
        %v2170 = vmul.f32 %v1763, %v2169
        %v2171 = vsub.f32 1.0, %v2170
        %v2172 = vmul.f32 %v2169, %v2171
        %v2173 = vadd.f32 %v2169, %v2172
        %vm2174 = vweird.f32 %v1763
        %vm2175 = vweird.f32 %v2169
        %vm2176 = vmor %vm2174, %vm2175
        %v2177 = vsel %vm2176, %v2169, %v2173
        %v2178 = vand.u32 2147483647, %v1763
        %vm2179 = vcmp.eq.f32.partialorder %v2178, 8.507059e+37
        %v2180 = vand.u32 %v1763, 2147483648
        %v2181 = vor.u32 1.1754944e-38, %v2180
        %v2182 = vsel %vm2179, %v2181, %v2177
        %v2183 = vmul.f32 1.0, %v2182
        %v2184 = vmul.f32 %v1486, %v1778
        %v2185 = vmul.f32 %v1530, %v1793
        %v2186 = vmul.f32 %v1488, %v1808
        %v2187 = vmul.f32 %v1532, %v1823
        %v2188 = vmul.f32 %v1491, %v1838
        %v2189 = vmul.f32 %v1535, %v1853
        %v2190 = vmul.f32 %v1493, %v1868
        %v2191 = vmul.f32 %v1537, %v1883
        %v2192 = vmul.f32 %v1496, %v1898
        %v2193 = vmul.f32 %v1540, %v1913
        %v2194 = vmul.f32 %v1498, %v1928
        %v2195 = vmul.f32 %v1542, %v1943
        %v2196 = vmul.f32 %v1501, %v1958
        %v2197 = vmul.f32 %v1545, %v1973
        %v2198 = vmul.f32 %v1503, %v1988
        %v2199 = vmul.f32 %v1547, %v2003
        %v2200 = vmul.f32 %v1506, %v2018
        %v2201 = vmul.f32 %v1550, %v2033
        %v2202 = vmul.f32 %v1508, %v2048
        %v2203 = vmul.f32 %v1552, %v2063
        %v2204 = vmul.f32 %v1511, %v2078
        %v2205 = vmul.f32 %v1555, %v2093
        %v2206 = vmul.f32 %v1513, %v2108
        %v2207 = vmul.f32 %v1557, %v2123
        %v2208 = vmul.f32 %v1516, %v2138
        %v2209 = vmul.f32 %v1560, %v2153
        %v2210 = vmul.f32 %v1518, %v2168
        %v2211 = vmul.f32 %v1562, %v2183
        %v2212 = vmul.f32 %v2184, %v1574
        %v2213 = vmul.f32 %v2185, %v1618
        %v2214 = vmul.f32 %v2186, %v1576
        %v2215 = vmul.f32 %v2187, %v1620
        %v2216 = vmul.f32 %v2188, %v1579
        %v2217 = vmul.f32 %v2189, %v1623
        %v2218 = vmul.f32 %v2190, %v1581
        %v2219 = vmul.f32 %v2191, %v1625
        %v2220 = vmul.f32 %v2192, %v1584
        %v2221 = vmul.f32 %v2193, %v1628
        %v2222 = vmul.f32 %v2194, %v1586
        %v2223 = vmul.f32 %v2195, %v1630
        %v2224 = vmul.f32 %v2196, %v1589
        %v2225 = vmul.f32 %v2197, %v1633
        %v2226 = vmul.f32 %v2198, %v1591
        %v2227 = vmul.f32 %v2199, %v1635
        %v2228 = vmul.f32 %v2200, %v1594
        %v2229 = vmul.f32 %v2201, %v1638
        %v2230 = vmul.f32 %v2202, %v1596
        %v2231 = vmul.f32 %v2203, %v1640
        %v2232 = vmul.f32 %v2204, %v1599
        %v2233 = vmul.f32 %v2205, %v1643
        %v2234 = vmul.f32 %v2206, %v1601
        %v2235 = vmul.f32 %v2207, %v1645
        %v2236 = vmul.f32 %v2208, %v1604
        %v2237 = vmul.f32 %v2209, %v1648
        %v2238 = vmul.f32 %v2210, %v1606
        %v2239 = vmul.f32 %v2211, %v1650
        %v2240 = vpack.c.bf16 %v2214, %v2212
        %v2241 = vpack.c.bf16 %v2215, %v2213
        %v2242 = vpack.c.bf16 %v2218, %v2216
        %v2243 = vpack.c.bf16 %v2219, %v2217
        %v2244 = vpack.c.bf16 %v2222, %v2220
        %v2245 = vpack.c.bf16 %v2223, %v2221
        %v2246 = vpack.c.bf16 %v2226, %v2224
        %v2247 = vpack.c.bf16 %v2227, %v2225
        %v2248 = vpack.c.bf16 %v2230, %v2228
        %v2249 = vpack.c.bf16 %v2231, %v2229
        %v2250 = vpack.c.bf16 %v2234, %v2232
        %v2251 = vpack.c.bf16 %v2235, %v2233
        %v2252 = vpack.c.bf16 %v2238, %v2236
        %v2253 = vpack.c.bf16 %v2239, %v2237
        %v2254 = vld [vmem:[#allocation7 + $0x80] sm:$0xf]
        %v2255 = vld [vmem:[#allocation7 + $0x84] sm:$0xf]
        %v2256 = vld [vmem:[#allocation7 + $0x88] sm:$0xf]
        %v2257 = vld [vmem:[#allocation7 + $0x8c] sm:$0xf]
        %v2258 = vld [vmem:[#allocation7 + $0x90] sm:$0xf]
        %v2259 = vld [vmem:[#allocation7 + $0x94] sm:$0xf]
        %v2260 = vld [vmem:[#allocation7 + $0x98] sm:$0xf]
        %v2261 = vld [vmem:[#allocation7 + $0x9c] sm:$0xf]
        %v2262 = vld [vmem:[#allocation7 + $0xa0] sm:$0xf]
        %v2263 = vld [vmem:[#allocation7 + $0xa4] sm:$0xf]
        %v2264 = vld [vmem:[#allocation7 + $0xa8] sm:$0xf]
        %v2265 = vld [vmem:[#allocation7 + $0xac] sm:$0xf]
        %v2266 = vld [vmem:[#allocation7 + $0xb0] sm:$0xf]
        %v2267 = vld [vmem:[#allocation7 + $0xb4] sm:$0xf]
        %v2268 = vld [vmem:[#allocation7 + $0xb8] sm:$0xf]
        %v2269 = vld [vmem:[#allocation7 + $0xbc] sm:$0xf]
        %v2270 = vld [vmem:[#allocation7 + $0xc0] sm:$0xf]
        %v2271 = vld [vmem:[#allocation7 + $0xc4] sm:$0xf]
        %v2272 = vld [vmem:[#allocation7 + $0xc8] sm:$0xf]
        %v2273 = vld [vmem:[#allocation7 + $0xcc] sm:$0xf]
        %v2274 = vld [vmem:[#allocation7 + $0xd0] sm:$0xf]
        %v2275 = vld [vmem:[#allocation7 + $0xd4] sm:$0xf]
        %v2276 = vld [vmem:[#allocation7 + $0xd8] sm:$0xf]
        %v2277 = vld [vmem:[#allocation7 + $0xdc] sm:$0xf]
        %v2278 = vld [vmem:[#allocation7 + $0xe0] sm:$0xf]
        %v2279 = vld [vmem:[#allocation7 + $0xe4] sm:$0xf]
        %v2280 = vld [vmem:[#allocation7 + $0xe8] sm:$0xf]
        %v2281 = vld [vmem:[#allocation7 + $0xec] sm:$0xf]
        %v2282 = vld [vmem:[#allocation7 + $0xf0] sm:$0xf]
        %v2283 = vld [vmem:[#allocation7 + $0xf4] sm:$0xf]
        %v2284 = vld [vmem:[#allocation7 + $0xf8] sm:$0xf]
        %v2285 = vld [vmem:[#allocation7 + $0xfc] sm:$0xf]
        %v2318 = vunpack.c.l.b16 %v2254
        %v2319 = vunpack.c.l.b16 %v2255
        %v2320 = vunpack.c.l.b16 %v2256
        %v2321 = vunpack.c.l.b16 %v2257
        %v2322 = vunpack.c.l.b16 %v2258
        %v2323 = vunpack.c.l.b16 %v2259
        %v2324 = vunpack.c.l.b16 %v2260
        %v2325 = vunpack.c.l.b16 %v2261
        %v2326 = vunpack.c.l.b16 %v2262
        %v2327 = vunpack.c.l.b16 %v2263
        %v2328 = vunpack.c.l.b16 %v2264
        %v2329 = vunpack.c.l.b16 %v2265
        %v2330 = vunpack.c.l.b16 %v2266
        %v2331 = vunpack.c.l.b16 %v2267
        %v2332 = vunpack.c.l.b16 %v2268
        %v2333 = vunpack.c.l.b16 %v2269
        %v2334 = vunpack.c.l.b16 %v2270
        %v2335 = vunpack.c.l.b16 %v2271
        %v2336 = vunpack.c.l.b16 %v2272
        %v2337 = vunpack.c.l.b16 %v2273
        %v2338 = vunpack.c.l.b16 %v2274
        %v2339 = vunpack.c.l.b16 %v2275
        %v2340 = vunpack.c.l.b16 %v2276
        %v2341 = vunpack.c.l.b16 %v2277
        %v2342 = vunpack.c.l.b16 %v2278
        %v2343 = vunpack.c.l.b16 %v2279
        %v2344 = vunpack.c.l.b16 %v2280
        %v2345 = vunpack.c.l.b16 %v2281
        %v2346 = vunpack.c.l.b16 %v2282
        %v2347 = vunpack.c.l.b16 %v2283
        %v2348 = vunpack.c.l.b16 %v2284
        %v2349 = vunpack.c.l.b16 %v2285
        %v2350 = vpack.c.b16 %v2319, %v2318
        %v2351 = vpack.c.b16 %v2321, %v2320
        %v2352 = vpack.c.b16 %v2323, %v2322
        %v2353 = vpack.c.b16 %v2325, %v2324
        %v2354 = vpack.c.b16 %v2327, %v2326
        %v2355 = vpack.c.b16 %v2329, %v2328
        %v2356 = vpack.c.b16 %v2331, %v2330
        %v2357 = vpack.c.b16 %v2333, %v2332
        %v2358 = vpack.c.b16 %v2335, %v2334
        %v2359 = vpack.c.b16 %v2337, %v2336
        %v2360 = vpack.c.b16 %v2339, %v2338
        %v2361 = vpack.c.b16 %v2341, %v2340
        %v2362 = vpack.c.b16 %v2343, %v2342
        %v2363 = vpack.c.b16 %v2345, %v2344
        %v2364 = vpack.c.b16 %v2347, %v2346
        %v2365 = vpack.c.b16 %v2349, %v2348
        %2382 = vmatpush.bf16.msra.mxu0 %v2357
        %2383 = vmatpush.bf16.msra.mxu0 %v2356
        %2384 = vmatpush.bf16.msra.mxu0 %v2355
        %2385 = vmatpush.bf16.msra.mxu0 %v2354
        %2386 = vmatpush.bf16.msra.mxu0 %v2353
        %2387 = vmatpush.bf16.msra.mxu0 %v2352
        %2388 = vmatpush.bf16.msra.mxu0 %v2351
        %2389 = vmatpush.bf16.msra.mxu0 %v2350
        %2390 = vmatmul.bf16.gmra.mxu0 %v2240
        %v2391 = vpop.f32.mrf.mxu0
        %v2392 = vadd.f32 0.0, %v2391
        %v2393 = vpop.f32.mrf.mxu0
        %v2394 = vadd.f32 0.0, %v2393
        %2395 = vmatmul.bf16.gmra.mxu0 %v2242
        %v2396 = vpop.f32.mrf.mxu0
        %v2397 = vadd.f32 0.0, %v2396
        %v2398 = vpop.f32.mrf.mxu0
        %v2399 = vadd.f32 0.0, %v2398
        %2400 = vmatmul.bf16.gmra.mxu0 %v2244
        %v2401 = vpop.f32.mrf.mxu0
        %v2402 = vadd.f32 0.0, %v2401
        %v2403 = vpop.f32.mrf.mxu0
        %v2404 = vadd.f32 0.0, %v2403
        %2405 = vmatmul.bf16.gmra.mxu0 %v2246
        %v2406 = vpop.f32.mrf.mxu0
        %v2407 = vadd.f32 0.0, %v2406
        %v2408 = vpop.f32.mrf.mxu0
        %v2409 = vadd.f32 0.0, %v2408
        %2410 = vmatmul.bf16.gmra.mxu0 %v2248
        %v2411 = vpop.f32.mrf.mxu0
        %v2412 = vadd.f32 0.0, %v2411
        %v2413 = vpop.f32.mrf.mxu0
        %v2414 = vadd.f32 0.0, %v2413
        %2415 = vmatmul.bf16.gmra.mxu0 %v2250
        %v2416 = vpop.f32.mrf.mxu0
        %v2417 = vadd.f32 0.0, %v2416
        %v2418 = vpop.f32.mrf.mxu0
        %v2419 = vadd.f32 0.0, %v2418
        %2420 = vmatmul.bf16.gmra.mxu0 %v2252
        %v2421 = vpop.f32.mrf.mxu0
        %v2422 = vadd.f32 0.0, %v2421
        %v2423 = vpop.f32.mrf.mxu0
        %v2424 = vadd.f32 0.0, %v2423
        %2425 = vdwg.mxu0
        %2426 = vmatpush.bf16.msra.mxu0 %v2365
        %2427 = vmatpush.bf16.msra.mxu0 %v2364
        %2428 = vmatpush.bf16.msra.mxu0 %v2363
        %2429 = vmatpush.bf16.msra.mxu0 %v2362
        %2430 = vmatpush.bf16.msra.mxu0 %v2361
        %2431 = vmatpush.bf16.msra.mxu0 %v2360
        %2432 = vmatpush.bf16.msra.mxu0 %v2359
        %2433 = vmatpush.bf16.msra.mxu0 %v2358
        %2434 = vmatmul.bf16.gmra.mxu0 %v2241
        %v2435 = vpop.f32.mrf.mxu0
        %v2436 = vadd.f32 %v2392, %v2435
        %v2437 = vpop.f32.mrf.mxu0
        %v2438 = vadd.f32 %v2394, %v2437
        %2439 = vmatmul.bf16.gmra.mxu0 %v2243
        %v2440 = vpop.f32.mrf.mxu0
        %v2441 = vadd.f32 %v2397, %v2440
        %v2442 = vpop.f32.mrf.mxu0
        %v2443 = vadd.f32 %v2399, %v2442
        %2444 = vmatmul.bf16.gmra.mxu0 %v2245
        %v2445 = vpop.f32.mrf.mxu0
        %v2446 = vadd.f32 %v2402, %v2445
        %v2447 = vpop.f32.mrf.mxu0
        %v2448 = vadd.f32 %v2404, %v2447
        %2449 = vmatmul.bf16.gmra.mxu0 %v2247
        %v2450 = vpop.f32.mrf.mxu0
        %v2451 = vadd.f32 %v2407, %v2450
        %v2452 = vpop.f32.mrf.mxu0
        %v2453 = vadd.f32 %v2409, %v2452
        %2454 = vmatmul.bf16.gmra.mxu0 %v2249
        %v2455 = vpop.f32.mrf.mxu0
        %v2456 = vadd.f32 %v2412, %v2455
        %v2457 = vpop.f32.mrf.mxu0
        %v2458 = vadd.f32 %v2414, %v2457
        %2459 = vmatmul.bf16.gmra.mxu0 %v2251
        %v2460 = vpop.f32.mrf.mxu0
        %v2461 = vadd.f32 %v2417, %v2460
        %v2462 = vpop.f32.mrf.mxu0
        %v2463 = vadd.f32 %v2419, %v2462
        %2464 = vmatmul.bf16.gmra.mxu0 %v2253
        %v2465 = vpop.f32.mrf.mxu0
        %v2466 = vadd.f32 %v2422, %v2465
        %v2467 = vpop.f32.mrf.mxu0
        %v2468 = vadd.f32 %v2424, %v2467
        %2469 = vdwg.mxu0
        %v2502 = vunpack.c.l.b16 %v1252
        %v2503 = vunpack.c.l.b16 %v1253
        %v2504 = vunpack.c.l.b16 %v1254
        %v2505 = vunpack.c.l.b16 %v1255
        %v2506 = vunpack.c.l.b16 %v1256
        %v2507 = vunpack.c.l.b16 %v1257
        %v2508 = vunpack.c.l.b16 %v1258
        %v2509 = vunpack.c.l.b16 %v1259
        %v2510 = vunpack.c.l.b16 %v1260
        %v2511 = vunpack.c.l.b16 %v1261
        %v2512 = vunpack.c.l.b16 %v1262
        %v2513 = vunpack.c.l.b16 %v1263
        %v2514 = vunpack.c.l.b16 %v1264
        %v2515 = vunpack.c.l.b16 %v1265
        %v2516 = vunpack.c.l.b16 %v1266
        %v2517 = vunpack.c.l.b16 %v1267
        %v2518 = vunpack.c.l.b16 %v1268
        %v2519 = vunpack.c.l.b16 %v1269
        %v2520 = vunpack.c.l.b16 %v1270
        %v2521 = vunpack.c.l.b16 %v1271
        %v2522 = vunpack.c.l.b16 %v1272
        %v2523 = vunpack.c.l.b16 %v1273
        %v2524 = vunpack.c.l.b16 %v1274
        %v2525 = vunpack.c.l.b16 %v1275
        %v2526 = vunpack.c.l.b16 %v1276
        %v2527 = vunpack.c.l.b16 %v1277
        %v2528 = vunpack.c.l.b16 %v1278
        %v2529 = vunpack.c.l.b16 %v1279
        %v2530 = vunpack.c.l.b16 %v1280
        %v2531 = vunpack.c.l.b16 %v1281
        %v2532 = vunpack.c.l.b16 %v1282
        %v2533 = vunpack.c.l.b16 %v1283
        %v2534 = vpack.c.b16 %v2503, %v2502
        %v2535 = vpack.c.b16 %v2505, %v2504
        %v2536 = vpack.c.b16 %v2507, %v2506
        %v2537 = vpack.c.b16 %v2509, %v2508
        %v2538 = vpack.c.b16 %v2511, %v2510
        %v2539 = vpack.c.b16 %v2513, %v2512
        %v2540 = vpack.c.b16 %v2515, %v2514
        %v2541 = vpack.c.b16 %v2517, %v2516
        %v2542 = vpack.c.b16 %v2519, %v2518
        %v2543 = vpack.c.b16 %v2521, %v2520
        %v2544 = vpack.c.b16 %v2523, %v2522
        %v2545 = vpack.c.b16 %v2525, %v2524
        %v2546 = vpack.c.b16 %v2527, %v2526
        %v2547 = vpack.c.b16 %v2529, %v2528
        %v2548 = vpack.c.b16 %v2531, %v2530
        %v2549 = vpack.c.b16 %v2533, %v2532
        %2566 = vmatpush.bf16.msra.mxu0 %v2541
        %2567 = vmatpush.bf16.msra.mxu0 %v2540
        %2568 = vmatpush.bf16.msra.mxu0 %v2539
        %2569 = vmatpush.bf16.msra.mxu0 %v2538
        %2570 = vmatpush.bf16.msra.mxu0 %v2537
        %2571 = vmatpush.bf16.msra.mxu0 %v2536
        %2572 = vmatpush.bf16.msra.mxu0 %v2535
        %2573 = vmatpush.bf16.msra.mxu0 %v2534
        %2574 = vmatmul.bf16.gmra.mxu0 %v1238
        %v2575 = vpop.f32.mrf.mxu0
        %v2576 = vadd.f32 %v2436, %v2575
        %v2577 = vpop.f32.mrf.mxu0
        %v2578 = vadd.f32 %v2438, %v2577
        %2579 = vmatmul.bf16.gmra.mxu0 %v1240
        %v2580 = vpop.f32.mrf.mxu0
        %v2581 = vadd.f32 %v2441, %v2580
        %v2582 = vpop.f32.mrf.mxu0
        %v2583 = vadd.f32 %v2443, %v2582
        %2584 = vmatmul.bf16.gmra.mxu0 %v1242
        %v2585 = vpop.f32.mrf.mxu0
        %v2586 = vadd.f32 %v2446, %v2585
        %v2587 = vpop.f32.mrf.mxu0
        %v2588 = vadd.f32 %v2448, %v2587
        %2589 = vmatmul.bf16.gmra.mxu0 %v1244
        %v2590 = vpop.f32.mrf.mxu0
        %v2591 = vadd.f32 %v2451, %v2590
        %v2592 = vpop.f32.mrf.mxu0
        %v2593 = vadd.f32 %v2453, %v2592
        %2594 = vmatmul.bf16.gmra.mxu0 %v1246
        %v2595 = vpop.f32.mrf.mxu0
        %v2596 = vadd.f32 %v2456, %v2595
        %v2597 = vpop.f32.mrf.mxu0
        %v2598 = vadd.f32 %v2458, %v2597
        %2599 = vmatmul.bf16.gmra.mxu0 %v1248
        %v2600 = vpop.f32.mrf.mxu0
        %v2601 = vadd.f32 %v2461, %v2600
        %v2602 = vpop.f32.mrf.mxu0
        %v2603 = vadd.f32 %v2463, %v2602
        %2604 = vmatmul.bf16.gmra.mxu0 %v1250
        %v2605 = vpop.f32.mrf.mxu0
        %v2606 = vadd.f32 %v2466, %v2605
        %v2607 = vpop.f32.mrf.mxu0
        %v2608 = vadd.f32 %v2468, %v2607
        %2609 = vdwg.mxu0
        %2610 = vmatpush.bf16.msra.mxu0 %v2549
        %2611 = vmatpush.bf16.msra.mxu0 %v2548
        %2612 = vmatpush.bf16.msra.mxu0 %v2547
        %2613 = vmatpush.bf16.msra.mxu0 %v2546
        %2614 = vmatpush.bf16.msra.mxu0 %v2545
        %2615 = vmatpush.bf16.msra.mxu0 %v2544
        %2616 = vmatpush.bf16.msra.mxu0 %v2543
        %2617 = vmatpush.bf16.msra.mxu0 %v2542
        %2618 = vmatmul.bf16.gmra.mxu0 %v1239
        %v2619 = vpop.f32.mrf.mxu0
        %v2620 = vadd.f32 %v2576, %v2619
        %v2621 = vpop.f32.mrf.mxu0
        %v2622 = vadd.f32 %v2578, %v2621
        %2623 = vmatmul.bf16.gmra.mxu0 %v1241
        %v2624 = vpop.f32.mrf.mxu0
        %v2625 = vadd.f32 %v2581, %v2624
        %v2626 = vpop.f32.mrf.mxu0
        %v2627 = vadd.f32 %v2583, %v2626
        %2628 = vmatmul.bf16.gmra.mxu0 %v1243
        %v2629 = vpop.f32.mrf.mxu0
        %v2630 = vadd.f32 %v2586, %v2629
        %v2631 = vpop.f32.mrf.mxu0
        %v2632 = vadd.f32 %v2588, %v2631
        %2633 = vmatmul.bf16.gmra.mxu0 %v1245
        %v2634 = vpop.f32.mrf.mxu0
        %v2635 = vadd.f32 %v2591, %v2634
        %v2636 = vpop.f32.mrf.mxu0
        %v2637 = vadd.f32 %v2593, %v2636
        %2638 = vmatmul.bf16.gmra.mxu0 %v1247
        %v2639 = vpop.f32.mrf.mxu0
        %v2640 = vadd.f32 %v2596, %v2639
        %v2641 = vpop.f32.mrf.mxu0
        %v2642 = vadd.f32 %v2598, %v2641
        %2643 = vmatmul.bf16.gmra.mxu0 %v1249
        %v2644 = vpop.f32.mrf.mxu0
        %v2645 = vadd.f32 %v2601, %v2644
        %v2646 = vpop.f32.mrf.mxu0
        %v2647 = vadd.f32 %v2603, %v2646
        %2648 = vmatmul.bf16.gmra.mxu0 %v1251
        %v2649 = vpop.f32.mrf.mxu0
        %v2650 = vadd.f32 %v2606, %v2649
        %v2651 = vpop.f32.mrf.mxu0
        %v2652 = vadd.f32 %v2608, %v2651
        %2653 = vdwg.mxu0
        %2654 = vst [vmem:[%s223] sm:$0xff] %v2620
        %2655 = vst [vmem:[%s223 + $0x8] sm:$0xff] %v2622
        %2656 = vst [vmem:[%s223 + $0x10] sm:$0xff] %v2625
        %2657 = vst [vmem:[%s223 + $0x18] sm:$0xff] %v2627
        %2658 = vst [vmem:[%s223 + $0x20] sm:$0xff] %v2630
        %2659 = vst [vmem:[%s223 + $0x28] sm:$0xff] %v2632
        %2660 = vst [vmem:[%s223 + $0x30] sm:$0xff] %v2635
        %2661 = vst [vmem:[%s223 + $0x38] sm:$0xff] %v2637
        %2662 = vst [vmem:[%s223 + $0x40] sm:$0xff] %v2640
        %2663 = vst [vmem:[%s223 + $0x48] sm:$0xff] %v2642
        %2664 = vst [vmem:[%s223 + $0x50] sm:$0xff] %v2645
        %2665 = vst [vmem:[%s223 + $0x58] sm:$0xff] %v2647
        %2666 = vst [vmem:[%s223 + $0x60] sm:$0xff] %v2650
        %2667 = vst [vmem:[%s223 + $0x68] sm:$0xff] %v2652
        %s2668 = sand.u32 %s97, 1
        %s2669 = scalar_lea.sflag [#allocation4], %s2668
        %s2670 = sand.u32 %s97, 1
        %s2671 = smul.addr %s2670, 112
        %s2672 = scalar_lea.vmem [#allocation8], %s2671
        // Predicated region
        $region45: #{tpu_custom_call.1} parent=31 // pred_check
          %p2673 = pneg %p107
        $region46: #{tpu_custom_call.1} parent=31 // pred_check_branch
          %2675 = sbr.rel (%p2673) target = $region48
        $region47: #{tpu_custom_call.1} parent=31 // pred_region
          %s2676 = smul.u32 14, %s21
          %2678 = vsyncadd %s2669, 0
          %s2679 = smul.addr %s2676, 8
          %s2680 = scalar_lea.hbm %s3, %s2679
          %s2681 = sshll.u32 %s2672, 4
          %s2682 = int_to_ptr.vmem [resolvable:$true] %s2681
          %s2683 = sshll.u32 %s2680, 4
          %s2684 = int_to_ptr.hbm [resolvable:$true] %s2683
          %2689 = dma.vmem_to_hbm [thread:$0]  %s2682, 1792, %s2684, %s2669, 128, 128, 8
        $region48: #{tpu_custom_call.1} parent=31 // pred_fallthru
          _
      $region32: #{tpu_custom_call.1} parent=5 // pred_fallthru
        _
      %p2690 = scmp.le.s32.totalorder 2, %s16
      // Predicated region
      $region49: #{tpu_custom_call.1} parent=5 // pred_check
        %p2691 = pneg %p2690
      $region50: #{tpu_custom_call.1} parent=5 // pred_check_branch
        %2693 = sbr.rel (%p2691) target = $region52
      $region51: #{tpu_custom_call.1} parent=5 // pred_region
        %s2694 = ssub.s32 %s16, 2
        // Predicated region
        $region53: #{tpu_custom_call.1} parent=51 // pred_check
          %p2695 = pneg %p113
        $region54: #{tpu_custom_call.1} parent=51 // pred_check_branch
          %2697 = sbr.rel (%p2695) target = $region56
        $region55: #{tpu_custom_call.1} parent=51 // pred_region
          %s2698 = sand.u32 %s98, 1
          %s2699 = scalar_lea.sflag [#allocation4], %s2698
          %s2700 = sand.u32 %s98, 1
          %s2701 = smul.addr %s2700, 112
          %s2702 = scalar_lea.vmem [#allocation8], %s2701
          %2704 = dma.done %s2699, 1792
        $region56: #{tpu_custom_call.1} parent=51 // pred_fallthru
          _
      $region52: #{tpu_custom_call.1} parent=5 // pred_fallthru
        _
    $region6: #{tpu_custom_call.1} parent=1 // loop_footer
      %s20 = sadd.s32 1, %s16
    $region7: #{tpu_custom_call.1} parent=1 // loop_footer_branch
      %15 = sbr.rel target = $region3
    $region8: #{tpu_custom_call.1} parent=1 // loop_exit
      _
    %2705 = vsyncpa [#allocation3], 1
    %s2706 = scalar_lea.sflag [#allocation3], 1
    %2707 = vsyncpa %s2706, 1
    %2708 = vsyncpa [#allocation6], 1
    %2709 = vsyncpa [#allocation4], 1
    %s2710 = scalar_lea.sflag [#allocation4], 1
    %2711 = vsyncpa %s2710, 1

</llo_original>
